<compile_context>
chip_gen: v7x
topology: tpu7x:2x2x1
jax: 0.10.0
libtpu: 0.0.40
codegen_flags: <defaults>
</compile_context>

<pallas_src>
import jax
import jax.numpy as jnp
from jax.experimental import pallas as pl
from jax.experimental.pallas import tpu as pltpu


def _rnnlm_block_kernel(xh_ref, rec0_ref, who_ref, bq_ref, out_ref, rec_ref):
    """Processes TT time steps per grid iteration. Grid axis 0 = time blocks."""
    # Initialize the carried recurrence term (h0 @ W_hh) once; it stays resident
    # in VMEM scratch across the whole sequential time grid.
    @pl.when(pl.program_id(0) == 0)
    def _():
        rec_ref[...] = rec0_ref[...]

    TT = xh_ref.shape[0]          # static time-block size
    V = bq_ref.shape[1]           # vocab size (lane-aligned split point)

    who = who_ref[...]            # (H, V+H) fused [W_hq | W_hh], loaded once
    rec = rec_ref[...]            # (B, H)   h_{t-1} @ W_hh

    logits = []
    for s in range(TT):           # full Python unroll (TT small & static)
        h = jnp.tanh(xh_ref[s] + rec)                                 # (B, H)
        z = jnp.dot(h, who, preferred_element_type=jnp.float32)       # (B, V+H)
        logits.append(z[:, :V])   # this step's pre-bias logits
        rec = z[:, V:]            # h_t @ W_hh, consumed at step t+1
    rec_ref[...] = rec

    # One lane-dense (B, TT, V) store; b_q broadcast-added once per grid step.
    out_ref[...] = (jnp.stack(logits, axis=1)
                    + bq_ref[...][None]).astype(out_ref.dtype)


def rnnlm_forward(X, W_xh, W_hh, b_h, W_hq, b_q, state=None, block_t=None):
    """Pallas forward of RNNLMScratch.

    X: (B, T) integer token ids. Returns logits of shape (B, T, V), matching
    torch.stack([H_t @ W_hq + b_q for t], dim=1).
    """
    B, T = X.shape
    V, H = W_xh.shape
    assert W_hh.shape == (H, H) and W_hq.shape == (H, V)
    assert b_h.shape == (H,) and b_q.shape == (V,)

    # Time-block size: largest of {8,4,2,1} dividing T (or user-provided).
    if block_t is None:
        block_t = next(tt for tt in (8, 4, 2, 1) if T % tt == 0)
    TT = block_t
    assert T % TT == 0

    f32 = jnp.float32
    Xi = X.astype(jnp.int32)

    # Embedding gather hoisted to XLA: one_hot(X.T, V) @ W_xh == W_xh[X.T].
    # Fold b_h in here so the kernel's per-step VPU work is just (+rec, tanh).
    xh = jnp.take(W_xh.astype(f32), Xi.T, axis=0) + b_h.astype(f32)   # (T, B, H)

    # Fused projection weights: one (B,H) x (H, V+H) MXU op per time step.
    # Logits occupy the lane-aligned columns [:V]; recurrence columns [V:].
    W_ho = jnp.concatenate([W_hq.astype(f32), W_hh.astype(f32)], axis=1)
    b_q2 = b_q.reshape(1, V).astype(f32)

    if state is None:
        rec0 = jnp.zeros((B, H), f32)
    else:
        h0 = jnp.asarray(state, f32).reshape(B, H)
        rec0 = jnp.dot(h0, W_hh.astype(f32))             # carried h0 @ W_hh

    const2d = lambda t: (0, 0)   # weights / biases / initial state: VMEM-resident

    out = pl.pallas_call(
        _rnnlm_block_kernel,
        out_shape=jax.ShapeDtypeStruct((B, T, V), f32),
        grid=(T // TT,),
        in_specs=[
            pl.BlockSpec((TT, B, H), lambda t: (t, 0, 0)),   # streamed embeddings
            pl.BlockSpec((B, H), const2d),                   # h0 @ W_hh
            pl.BlockSpec((H, V + H), const2d),               # fused [W_hq | W_hh]
            pl.BlockSpec((1, V), const2d),                   # b_q
        ],
        out_specs=pl.BlockSpec((B, TT, V), lambda t: (0, t, 0)),  # (B,T,V) direct
        scratch_shapes=[pltpu.VMEM((B, H), jnp.float32)],    # carried recurrence
        compiler_params=pltpu.CompilerParams(
            dimension_semantics=("arbitrary",)),             # time is sequential
    )(xh, rec0, W_ho, b_q2)
    return out
    # TODO(synk): single-buffer the constant-index-map inputs
    #   (pipeline_mode=pl.Buffered(1)) to halve resident-weight VMEM on v7x.
    # TODO(synk): at real vocab/hidden sizes, add a "parallel" grid axis over
    #   batch and/or tile the vocab of the fused projection (TN multiples of
    #   256 on v6e/v7x, 128 on v5e), and cast resident weights to bf16.


def rnnlm_reference(X, W_xh, W_hh, b_h, W_hq, b_q, h0=None):
    """Pure-JAX reference matching the PyTorch RNNLMScratch forward."""
    B, T = X.shape
    V, H = W_xh.shape
    hp = jax.lax.Precision.HIGHEST
    embs = jax.nn.one_hot(X.T, V, dtype=jnp.float32)        # (T, B, V)
    h = jnp.zeros((B, H), jnp.float32) if h0 is None else jnp.asarray(h0, jnp.float32)
    outs = []
    for t in range(T):
        h = jnp.tanh(jnp.dot(embs[t], W_xh, precision=hp)
                     + jnp.dot(h, W_hh, precision=hp) + b_h)
        outs.append(jnp.dot(h, W_hq, precision=hp) + b_q)
    return jnp.stack(outs, axis=1)                           # (B, T, V)


if __name__ == "__main__":
    # Small, deterministic demo: batch=8, seq=16, vocab=128, hidden=32.
    # T=16 with TT=8 -> grid of 2, exercising the cross-block recurrence carry.
    B, T, V, H = 8, 16, 128, 32
    sigma = 0.1

    key = jax.random.PRNGKey(0)
    k_x, k1, k2, k3, k4 = jax.random.split(key, 5)
    X = jax.random.randint(k_x, (B, T), 0, V, dtype=jnp.int32)
    W_xh = sigma * jax.random.normal(k1, (V, H), dtype=jnp.float32)
    W_hh = sigma * jax.random.normal(k2, (H, H), dtype=jnp.float32)
    b_h = jnp.zeros((H,), jnp.float32)
    W_hq = sigma * jax.random.normal(k3, (H, V), dtype=jnp.float32)
    b_q = jnp.zeros((V,), jnp.float32)

    # Default path: state=None (matches module's forward default).
    out = rnnlm_forward(X, W_xh, W_hh, b_h, W_hq, b_q)
    out = jax.block_until_ready(out)
    ref = rnnlm_reference(X, W_xh, W_hh, b_h, W_hq, b_q)
    assert out.shape == (B, T, V) and out.dtype == jnp.float32
    max_err = float(jnp.max(jnp.abs(out - ref)))
    assert bool(jnp.allclose(out, ref, atol=2e-3, rtol=2e-3)), max_err

    # Nonzero initial state path.
    h0 = 0.5 * jax.random.normal(k4, (B, H), dtype=jnp.float32)
    out2 = jax.block_until_ready(
        rnnlm_forward(X, W_xh, W_hh, b_h, W_hq, b_q, state=h0))
    ref2 = rnnlm_reference(X, W_xh, W_hh, b_h, W_hq, b_q, h0=h0)
    max_err2 = float(jnp.max(jnp.abs(out2 - ref2)))
    assert bool(jnp.allclose(out2, ref2, atol=2e-3, rtol=2e-3)), max_err2

    print("KERNEL_OK")
</pallas_src>

<mosaic_0001>
module attributes {stable_mosaic.version = 11 : i64} {
  func.func @_rnnlm_block_kernel(%arg0: i32, %arg1: memref<8x8x32xf32, #tpu.memory_space<vmem>>, %arg2: memref<8x32xf32, #tpu.memory_space<vmem>>, %arg3: memref<32x160xf32, #tpu.memory_space<vmem>>, %arg4: memref<1x128xf32, #tpu.memory_space<vmem>>, %arg5: memref<8x8x128xf32, #tpu.memory_space<vmem>>, %arg6: memref<8x32xf32, #tpu.memory_space<vmem>>) attributes {dimension_semantics = [#tpu.dimension_semantics<arbitrary>], iteration_bounds = array<i64: 2>, scalar_prefetch = 0 : i64, scratch_operands = 1 : i64, tpu.core_type = #tpu.core_type<tc>, window_params = [{transform_indices = @transform_0, window_bounds = array<i64: 8, 8, 32>}, {pipeline_mode = #tpu.pipeline_mode<synchronous>, transform_indices = @transform_1, window_bounds = array<i64: 8, 32>}, {pipeline_mode = #tpu.pipeline_mode<synchronous>, transform_indices = @transform_2, window_bounds = array<i64: 32, 160>}, {pipeline_mode = #tpu.pipeline_mode<synchronous>, transform_indices = @transform_3, window_bounds = array<i64: 1, 128>}, {transform_indices = @transform_4, window_bounds = array<i64: 8, 8, 128>}]} {
    %c0_i32 = arith.constant 0 : i32
    %0 = arith.cmpi eq, %arg0, %c0_i32 : i32
    %1 = arith.extui %0 : i1 to i32
    %c0_i32_0 = arith.constant 0 : i32
    %2 = arith.cmpi ne, %1, %c0_i32_0 : i32
    scf.if %2 {
      %c0_35 = arith.constant 0 : index
      %c0_36 = arith.constant 0 : index
      %76 = vector.load %arg2[%c0_35, %c0_36] : memref<8x32xf32, #tpu.memory_space<vmem>>, vector<8x32xf32>
      %c0_37 = arith.constant 0 : index
      %c0_38 = arith.constant 0 : index
      %77 = vector.load %arg6[%c0_37, %c0_38] : memref<8x32xf32, #tpu.memory_space<vmem>>, vector<8x32xf32>
      tpu.vector_store %arg6[%c0_37, %c0_38], %76 {strides = array<i32>} : memref<8x32xf32, #tpu.memory_space<vmem>>, vector<8x32xf32>,
    } else {
    }
    %c0 = arith.constant 0 : index
    %c0_1 = arith.constant 0 : index
    %3 = vector.load %arg3[%c0, %c0_1] : memref<32x160xf32, #tpu.memory_space<vmem>>, vector<32x160xf32>
    %c0_2 = arith.constant 0 : index
    %c0_3 = arith.constant 0 : index
    %4 = vector.load %arg6[%c0_2, %c0_3] : memref<8x32xf32, #tpu.memory_space<vmem>>, vector<8x32xf32>
    %c0_4 = arith.constant 0 : index
    %c0_5 = arith.constant 0 : index
    %c0_6 = arith.constant 0 : index
    %5 = vector.load %arg1[%c0_4, %c0_5, %c0_6] : memref<8x8x32xf32, #tpu.memory_space<vmem>>, vector<1x8x32xf32>
    %6 = vector.shape_cast %5 : vector<1x8x32xf32> to vector<8x32xf32>
    %7 = arith.addf %6, %4 : vector<8x32xf32>
    %8 = math.tanh %7 : vector<8x32xf32>
    %cst = arith.constant dense<0.000000e+00> : vector<8x160xf32>
    %9 = tpu.matmul %8, %3, %cst {dimension_numbers = #tpu.dot_dimension_numbers<[1], [0], [0], [1], [0, 0, 1, 1], [], []>} : vector<8x32xf32>, vector<32x160xf32>, vector<8x160xf32> -> vector<8x160xf32>
    %10 = vector.extract_strided_slice %9 {offsets = [0, 0], sizes = [8, 128], strides = [1, 1]} : vector<8x160xf32> to vector<8x128xf32>
    %11 = vector.extract_strided_slice %9 {offsets = [0, 128], sizes = [8, 32], strides = [1, 1]} : vector<8x160xf32> to vector<8x32xf32>
    %c1 = arith.constant 1 : index
    %c0_7 = arith.constant 0 : index
    %c0_8 = arith.constant 0 : index
    %12 = vector.load %arg1[%c1, %c0_7, %c0_8] : memref<8x8x32xf32, #tpu.memory_space<vmem>>, vector<1x8x32xf32>
    %13 = vector.shape_cast %12 : vector<1x8x32xf32> to vector<8x32xf32>
    %14 = arith.addf %13, %11 : vector<8x32xf32>
    %15 = math.tanh %14 : vector<8x32xf32>
    %cst_9 = arith.constant dense<0.000000e+00> : vector<8x160xf32>
    %16 = tpu.matmul %15, %3, %cst_9 {dimension_numbers = #tpu.dot_dimension_numbers<[1], [0], [0], [1], [0, 0, 1, 1], [], []>} : vector<8x32xf32>, vector<32x160xf32>, vector<8x160xf32> -> vector<8x160xf32>
    %17 = vector.extract_strided_slice %16 {offsets = [0, 0], sizes = [8, 128], strides = [1, 1]} : vector<8x160xf32> to vector<8x128xf32>
    %18 = vector.extract_strided_slice %16 {offsets = [0, 128], sizes = [8, 32], strides = [1, 1]} : vector<8x160xf32> to vector<8x32xf32>
    %c2 = arith.constant 2 : index
    %c0_10 = arith.constant 0 : index
    %c0_11 = arith.constant 0 : index
    %19 = vector.load %arg1[%c2, %c0_10, %c0_11] : memref<8x8x32xf32, #tpu.memory_space<vmem>>, vector<1x8x32xf32>
    %20 = vector.shape_cast %19 : vector<1x8x32xf32> to vector<8x32xf32>
    %21 = arith.addf %20, %18 : vector<8x32xf32>
    %22 = math.tanh %21 : vector<8x32xf32>
    %cst_12 = arith.constant dense<0.000000e+00> : vector<8x160xf32>
    %23 = tpu.matmul %22, %3, %cst_12 {dimension_numbers = #tpu.dot_dimension_numbers<[1], [0], [0], [1], [0, 0, 1, 1], [], []>} : vector<8x32xf32>, vector<32x160xf32>, vector<8x160xf32> -> vector<8x160xf32>
    %24 = vector.extract_strided_slice %23 {offsets = [0, 0], sizes = [8, 128], strides = [1, 1]} : vector<8x160xf32> to vector<8x128xf32>
    %25 = vector.extract_strided_slice %23 {offsets = [0, 128], sizes = [8, 32], strides = [1, 1]} : vector<8x160xf32> to vector<8x32xf32>
    %c3 = arith.constant 3 : index
    %c0_13 = arith.constant 0 : index
    %c0_14 = arith.constant 0 : index
    %26 = vector.load %arg1[%c3, %c0_13, %c0_14] : memref<8x8x32xf32, #tpu.memory_space<vmem>>, vector<1x8x32xf32>
    %27 = vector.shape_cast %26 : vector<1x8x32xf32> to vector<8x32xf32>
    %28 = arith.addf %27, %25 : vector<8x32xf32>
    %29 = math.tanh %28 : vector<8x32xf32>
    %cst_15 = arith.constant dense<0.000000e+00> : vector<8x160xf32>
    %30 = tpu.matmul %29, %3, %cst_15 {dimension_numbers = #tpu.dot_dimension_numbers<[1], [0], [0], [1], [0, 0, 1, 1], [], []>} : vector<8x32xf32>, vector<32x160xf32>, vector<8x160xf32> -> vector<8x160xf32>
    %31 = vector.extract_strided_slice %30 {offsets = [0, 0], sizes = [8, 128], strides = [1, 1]} : vector<8x160xf32> to vector<8x128xf32>
    %32 = vector.extract_strided_slice %30 {offsets = [0, 128], sizes = [8, 32], strides = [1, 1]} : vector<8x160xf32> to vector<8x32xf32>
    %c4 = arith.constant 4 : index
    %c0_16 = arith.constant 0 : index
    %c0_17 = arith.constant 0 : index
    %33 = vector.load %arg1[%c4, %c0_16, %c0_17] : memref<8x8x32xf32, #tpu.memory_space<vmem>>, vector<1x8x32xf32>
    %34 = vector.shape_cast %33 : vector<1x8x32xf32> to vector<8x32xf32>
    %35 = arith.addf %34, %32 : vector<8x32xf32>
    %36 = math.tanh %35 : vector<8x32xf32>
    %cst_18 = arith.constant dense<0.000000e+00> : vector<8x160xf32>
    %37 = tpu.matmul %36, %3, %cst_18 {dimension_numbers = #tpu.dot_dimension_numbers<[1], [0], [0], [1], [0, 0, 1, 1], [], []>} : vector<8x32xf32>, vector<32x160xf32>, vector<8x160xf32> -> vector<8x160xf32>
    %38 = vector.extract_strided_slice %37 {offsets = [0, 0], sizes = [8, 128], strides = [1, 1]} : vector<8x160xf32> to vector<8x128xf32>
    %39 = vector.extract_strided_slice %37 {offsets = [0, 128], sizes = [8, 32], strides = [1, 1]} : vector<8x160xf32> to vector<8x32xf32>
    %c5 = arith.constant 5 : index
    %c0_19 = arith.constant 0 : index
    %c0_20 = arith.constant 0 : index
    %40 = vector.load %arg1[%c5, %c0_19, %c0_20] : memref<8x8x32xf32, #tpu.memory_space<vmem>>, vector<1x8x32xf32>
    %41 = vector.shape_cast %40 : vector<1x8x32xf32> to vector<8x32xf32>
    %42 = arith.addf %41, %39 : vector<8x32xf32>
    %43 = math.tanh %42 : vector<8x32xf32>
    %cst_21 = arith.constant dense<0.000000e+00> : vector<8x160xf32>
    %44 = tpu.matmul %43, %3, %cst_21 {dimension_numbers = #tpu.dot_dimension_numbers<[1], [0], [0], [1], [0, 0, 1, 1], [], []>} : vector<8x32xf32>, vector<32x160xf32>, vector<8x160xf32> -> vector<8x160xf32>
    %45 = vector.extract_strided_slice %44 {offsets = [0, 0], sizes = [8, 128], strides = [1, 1]} : vector<8x160xf32> to vector<8x128xf32>
    %46 = vector.extract_strided_slice %44 {offsets = [0, 128], sizes = [8, 32], strides = [1, 1]} : vector<8x160xf32> to vector<8x32xf32>
    %c6 = arith.constant 6 : index
    %c0_22 = arith.constant 0 : index
    %c0_23 = arith.constant 0 : index
    %47 = vector.load %arg1[%c6, %c0_22, %c0_23] : memref<8x8x32xf32, #tpu.memory_space<vmem>>, vector<1x8x32xf32>
    %48 = vector.shape_cast %47 : vector<1x8x32xf32> to vector<8x32xf32>
    %49 = arith.addf %48, %46 : vector<8x32xf32>
    %50 = math.tanh %49 : vector<8x32xf32>
    %cst_24 = arith.constant dense<0.000000e+00> : vector<8x160xf32>
    %51 = tpu.matmul %50, %3, %cst_24 {dimension_numbers = #tpu.dot_dimension_numbers<[1], [0], [0], [1], [0, 0, 1, 1], [], []>} : vector<8x32xf32>, vector<32x160xf32>, vector<8x160xf32> -> vector<8x160xf32>
    %52 = vector.extract_strided_slice %51 {offsets = [0, 0], sizes = [8, 128], strides = [1, 1]} : vector<8x160xf32> to vector<8x128xf32>
    %53 = vector.extract_strided_slice %51 {offsets = [0, 128], sizes = [8, 32], strides = [1, 1]} : vector<8x160xf32> to vector<8x32xf32>
    %c7 = arith.constant 7 : index
    %c0_25 = arith.constant 0 : index
    %c0_26 = arith.constant 0 : index
    %54 = vector.load %arg1[%c7, %c0_25, %c0_26] : memref<8x8x32xf32, #tpu.memory_space<vmem>>, vector<1x8x32xf32>
    %55 = vector.shape_cast %54 : vector<1x8x32xf32> to vector<8x32xf32>
    %56 = arith.addf %55, %53 : vector<8x32xf32>
    %57 = math.tanh %56 : vector<8x32xf32>
    %cst_27 = arith.constant dense<0.000000e+00> : vector<8x160xf32>
    %58 = tpu.matmul %57, %3, %cst_27 {dimension_numbers = #tpu.dot_dimension_numbers<[1], [0], [0], [1], [0, 0, 1, 1], [], []>} : vector<8x32xf32>, vector<32x160xf32>, vector<8x160xf32> -> vector<8x160xf32>
    %59 = vector.extract_strided_slice %58 {offsets = [0, 0], sizes = [8, 128], strides = [1, 1]} : vector<8x160xf32> to vector<8x128xf32>
    %60 = vector.extract_strided_slice %58 {offsets = [0, 128], sizes = [8, 32], strides = [1, 1]} : vector<8x160xf32> to vector<8x32xf32>
    %c0_28 = arith.constant 0 : index
    %c0_29 = arith.constant 0 : index
    %61 = vector.load %arg6[%c0_28, %c0_29] : memref<8x32xf32, #tpu.memory_space<vmem>>, vector<8x32xf32>
    tpu.vector_store %arg6[%c0_28, %c0_29], %60 {strides = array<i32>} : memref<8x32xf32, #tpu.memory_space<vmem>>, vector<8x32xf32>,
    %62 = vector.shape_cast %10 : vector<8x128xf32> to vector<8x1x128xf32>
    %63 = vector.shape_cast %17 : vector<8x128xf32> to vector<8x1x128xf32>
    %64 = vector.shape_cast %24 : vector<8x128xf32> to vector<8x1x128xf32>
    %65 = vector.shape_cast %31 : vector<8x128xf32> to vector<8x1x128xf32>
    %66 = vector.shape_cast %38 : vector<8x128xf32> to vector<8x1x128xf32>
    %67 = vector.shape_cast %45 : vector<8x128xf32> to vector<8x1x128xf32>
    %68 = vector.shape_cast %52 : vector<8x128xf32> to vector<8x1x128xf32>
    %69 = vector.shape_cast %59 : vector<8x128xf32> to vector<8x1x128xf32>
    %70 = tpu.concatenate %62, %63, %64, %65, %66, %67, %68, %69 in 1 : vector<8x1x128xf32>, vector<8x1x128xf32>, vector<8x1x128xf32>, vector<8x1x128xf32>, vector<8x1x128xf32>, vector<8x1x128xf32>, vector<8x1x128xf32>, vector<8x1x128xf32> -> vector<8x8x128xf32>
    %c0_30 = arith.constant 0 : index
    %c0_31 = arith.constant 0 : index
    %71 = vector.load %arg4[%c0_30, %c0_31] : memref<1x128xf32, #tpu.memory_space<vmem>>, vector<1x128xf32>
    %72 = vector.shape_cast %71 : vector<1x128xf32> to vector<1x1x128xf32>
    %73 = vector.broadcast %72 : vector<1x1x128xf32> to vector<8x8x128xf32>
    %74 = arith.addf %70, %73 : vector<8x8x128xf32>
    %c0_32 = arith.constant 0 : index
    %c0_33 = arith.constant 0 : index
    %c0_34 = arith.constant 0 : index
    %75 = vector.load %arg5[%c0_32, %c0_33, %c0_34] : memref<8x8x128xf32, #tpu.memory_space<vmem>>, vector<8x8x128xf32>
    tpu.vector_store %arg5[%c0_32, %c0_33, %c0_34], %74 {strides = array<i32>} : memref<8x8x128xf32, #tpu.memory_space<vmem>>, vector<8x8x128xf32>,
    return
  }
  func.func @transform_0(%arg0: i32) -> (i32, i32, i32) {
    %c0_i32 = arith.constant 0 : i32
    %c0_i32_0 = arith.constant 0 : i32
    %c0_i32_1 = arith.constant 0 : i32
    return %arg0, %c0_i32, %c0_i32_0 : i32, i32, i32
  }
  func.func @transform_1(%arg0: i32) -> (i32, i32) {
    %c0_i32 = arith.constant 0 : i32
    %c0_i32_0 = arith.constant 0 : i32
    %c0_i32_1 = arith.constant 0 : i32
    return %c0_i32, %c0_i32_0 : i32, i32
  }
  func.func @transform_2(%arg0: i32) -> (i32, i32) {
    %c0_i32 = arith.constant 0 : i32
    %c0_i32_0 = arith.constant 0 : i32
    %c0_i32_1 = arith.constant 0 : i32
    return %c0_i32, %c0_i32_0 : i32, i32
  }
  func.func @transform_3(%arg0: i32) -> (i32, i32) {
    %c0_i32 = arith.constant 0 : i32
    %c0_i32_0 = arith.constant 0 : i32
    %c0_i32_1 = arith.constant 0 : i32
    return %c0_i32, %c0_i32_0 : i32, i32
  }
  func.func @transform_4(%arg0: i32) -> (i32, i32, i32) {
    %c0_i32 = arith.constant 0 : i32
    %c0_i32_0 = arith.constant 0 : i32
    %c0_i32_1 = arith.constant 0 : i32
    return %c0_i32, %arg0, %c0_i32_0 : i32, i32, i32
  }
}

</mosaic_0001>

<llo_original>
// kernel: tpu_custom_call.1
$region0: #{tpu_custom_call.1}
  #allocation0 [shape = 'u32[]', space=smem, size = 0x4, offset = 0x4, fixed_abs, tag = 'smem constant byte address 0x4 - core index']
  #allocation1 [shape = 'u32[144,128]{1,0:T(1,128)}', space=vmem, size = 0x12000, scoped, tag = 'internal scratch']
  #allocation2 [shape = 'f32[8,32]{1,0:T(8,128)}', space=vmem, size = 0x1000, scoped, tag = 'scratch operand']
  %s0 = inlined_call_operand.hbm [shape: f32[16,8,32], index: 0, kind: input, shape index: {}]
  %s1 = inlined_call_operand.hbm [shape: f32[8,32], index: 1, kind: input, shape index: {}]
  %s2 = inlined_call_operand.hbm [shape: f32[32,160], index: 2, kind: input, shape index: {}]
  %s3 = inlined_call_operand.vmem [shape: f32[1,128], index: 3, kind: input, shape index: {}]
  %s4 = inlined_call_operand.hbm [shape: f32[8,16,128], index: 4, kind: output, shape index: {}]
  %s5 = sld [smem:[#allocation0]]
  $region65: #{tpu_custom_call.1} parent=0
    _
  %s7 = ssub.s32 1, %s5
  %s8 = scalar_select 0, %s7, %s5
  $region1: #{tpu_custom_call.1} parent=0
    #allocation3 [shape = 'u8[65536]{0}', space=vmem, size = 0x10000, scoped, tag = 'input window, operand 0']
    #allocation4 [shape = 's32[2]{0}', space=sflag, size = 0x8, scoped, tag = 'scoped memory for tpu_custom_call.1']
    #allocation5 [shape = 's32[2]{0}', space=sflag, size = 0x8, scoped, tag = 'scoped memory for tpu_custom_call.1']
    #allocation6 [shape = 'u8[4096]{0}', space=vmem, size = 0x1000, scoped, tag = 'input window, operand 1, single buffered']
    #allocation7 [shape = 's32[1]{0}', space=sflag, size = 0x4, scoped, tag = 'scoped memory for tpu_custom_call.1']
    #allocation8 [shape = 'u8[32768]{0}', space=vmem, size = 0x8000, scoped, tag = 'input window, operand 2, single buffered']
    #allocation9 [shape = 'u8[65536]{0}', space=vmem, size = 0x10000, scoped, tag = 'output window, operand 0']
    %9 = vsyncpa [#allocation4], 0
    %s10 = scalar_lea.sflag [#allocation4], 1
    %11 = vsyncpa %s10, 0
    %12 = vsyncpa [#allocation7], 0
    %13 = vsyncpa [#allocation5], 0
    %s14 = scalar_lea.sflag [#allocation5], 1
    %15 = vsyncpa %s14, 0
    loop: start=0, step=1, limit=4
    $region2: #{tpu_custom_call.1} parent=1 // loop_pre_header
      _
    $region3: #{tpu_custom_call.1} parent=1 // loop_header
      %s17 = sphi 0, %s21
      %p18 = scmp.ge.s32.totalorder %s17, 4
      %s27 = sphi 0, %s29
      %s30 = sphi 0, %s27
      %s31 = sphi 0, %s30
      %s47 = sphi 0, %s31
      %s51 = sphi 0, %s51
      %s53 = sphi 0, %s51
      %s54 = sphi 0, %s53
      %s68 = sphi 0, %s54
      %s72 = sphi 0, %s72
      %s74 = sphi 0, %s72
      %s75 = sphi 0, %s74
      %s89 = sphi 0, %s75
      %s93 = sphi 0, %s93
      %s95 = sphi 0, %s93
      %s96 = sphi 0, %s95
      %s110 = sphi 0, %s96
      %s116 = sphi 0, %s118
      %s119 = sphi 0, %s116
      %s120 = sphi 0, %s119
      %s136 = sphi 0, %s120
    $region4: #{tpu_custom_call.1} parent=1 // loop_header_branch
      %20 = sbr.rel (%p18) target = $region8
    $region5: #{tpu_custom_call.1} parent=1 // loop_body
      %s22 = ssub.s32 %s17, 1
      %s23 = ssub.s32 %s17, 2
      %s24 = sadd.s32 %s17, 1
      %s25 = ssub.s32 %s17, %s24
      %p26 = scmp.eq.s32.totalorder %s25, 0
      %s28 = sadd.s32 %s27, 1
      %s29 = scalar_select %p26, %s27, %s28
      %p32 = pneg %p26
      %p33 = scmp.eq.s32.totalorder %s17, 1
      %p34 = por %p32, %p33
      %p35 = scmp.ne.s32.totalorder %s27, %s30
      %p36 = scmp.eq.s32.totalorder %s17, 0
      %p37 = por %p35, %p36
      %p38 = scmp.ne.s32.totalorder %s27, %s30
      %p39 = scmp.eq.s32.totalorder %s22, 1
      %p40 = por %p38, %p39
      %p41 = scmp.ne.s32.totalorder %s30, %s31
      %p42 = scmp.eq.s32.totalorder %s22, 0
      %p43 = por %p41, %p42
      %p44 = scmp.ne.s32.totalorder %s30, %s31
      %p45 = scmp.eq.s32.totalorder %s23, 1
      %p46 = por %p44, %p45
      %p48 = scmp.ne.s32.totalorder %s31, %s47
      %p49 = scmp.eq.s32.totalorder %s23, 0
      %p50 = por %p48, %p49
      %s52 = sadd.s32 %s51, 1
      %p55 = scmp.eq.s32.totalorder %s17, 1
      %p56 = scmp.ne.s32.totalorder %s51, %s53
      %p57 = scmp.eq.s32.totalorder %s17, 0
      %p58 = por %p56, %p57
      %p59 = scmp.ne.s32.totalorder %s51, %s53
      %p60 = scmp.eq.s32.totalorder %s22, 1
      %p61 = por %p59, %p60
      %p62 = scmp.ne.s32.totalorder %s53, %s54
      %p63 = scmp.eq.s32.totalorder %s22, 0
      %p64 = por %p62, %p63
      %p65 = scmp.ne.s32.totalorder %s53, %s54
      %p66 = scmp.eq.s32.totalorder %s23, 1
      %p67 = por %p65, %p66
      %p69 = scmp.ne.s32.totalorder %s54, %s68
      %p70 = scmp.eq.s32.totalorder %s23, 0
      %p71 = por %p69, %p70
      %s73 = sadd.s32 %s72, 1
      %p76 = scmp.eq.s32.totalorder %s17, 1
      %p77 = scmp.ne.s32.totalorder %s72, %s74
      %p78 = scmp.eq.s32.totalorder %s17, 0
      %p79 = por %p77, %p78
      %p80 = scmp.ne.s32.totalorder %s72, %s74
      %p81 = scmp.eq.s32.totalorder %s22, 1
      %p82 = por %p80, %p81
      %p83 = scmp.ne.s32.totalorder %s74, %s75
      %p84 = scmp.eq.s32.totalorder %s22, 0
      %p85 = por %p83, %p84
      %p86 = scmp.ne.s32.totalorder %s74, %s75
      %p87 = scmp.eq.s32.totalorder %s23, 1
      %p88 = por %p86, %p87
      %p90 = scmp.ne.s32.totalorder %s75, %s89
      %p91 = scmp.eq.s32.totalorder %s23, 0
      %p92 = por %p90, %p91
      %s94 = sadd.s32 %s93, 1
      %p97 = scmp.eq.s32.totalorder %s17, 1
      %p98 = scmp.ne.s32.totalorder %s93, %s95
      %p99 = scmp.eq.s32.totalorder %s17, 0
      %p100 = por %p98, %p99
      %p101 = scmp.ne.s32.totalorder %s93, %s95
      %p102 = scmp.eq.s32.totalorder %s22, 1
      %p103 = por %p101, %p102
      %p104 = scmp.ne.s32.totalorder %s95, %s96
      %p105 = scmp.eq.s32.totalorder %s22, 0
      %p106 = por %p104, %p105
      %p107 = scmp.ne.s32.totalorder %s95, %s96
      %p108 = scmp.eq.s32.totalorder %s23, 1
      %p109 = por %p107, %p108
      %p111 = scmp.ne.s32.totalorder %s96, %s110
      %p112 = scmp.eq.s32.totalorder %s23, 0
      %p113 = por %p111, %p112
      %s114 = ssub.s32 %s17, %s24
      %p115 = scmp.eq.s32.totalorder %s114, 0
      %s117 = sadd.s32 %s116, 1
      %s118 = scalar_select %p115, %s116, %s117
      %p121 = pneg %p115
      %p122 = scmp.eq.s32.totalorder %s17, 1
      %p123 = por %p121, %p122
      %p124 = scmp.ne.s32.totalorder %s116, %s119
      %p125 = scmp.eq.s32.totalorder %s17, 0
      %p126 = por %p124, %p125
      %p127 = scmp.ne.s32.totalorder %s116, %s119
      %p128 = scmp.eq.s32.totalorder %s22, 1
      %p129 = por %p127, %p128
      %p130 = scmp.ne.s32.totalorder %s119, %s120
      %p131 = scmp.eq.s32.totalorder %s22, 0
      %p132 = por %p130, %p131
      %p133 = scmp.ne.s32.totalorder %s119, %s120
      %p134 = scmp.eq.s32.totalorder %s23, 1
      %p135 = por %p133, %p134
      %p137 = scmp.ne.s32.totalorder %s120, %s136
      %p138 = scmp.eq.s32.totalorder %s23, 0
      %p139 = por %p137, %p138
      %p140 = scmp.le.s32.totalorder 1, %s17
      %p141 = scmp.lt.s32.totalorder %s17, 3
      %p142 = pnand %p140, %p141
      %p143 = pneg %p142
      // Predicated region
      $region9: #{tpu_custom_call.1} parent=5 // pred_check
        _
      $region10: #{tpu_custom_call.1} parent=5 // pred_check_branch
        %145 = sbr.rel (%p142) target = $region12
      $region11: #{tpu_custom_call.1} parent=5 // pred_region
        %s146 = ssub.s32 %s17, 1
        // Predicated region
        $region13: #{tpu_custom_call.1} parent=11 // pred_check
          %p147 = pneg %p64
        $region14: #{tpu_custom_call.1} parent=11 // pred_check_branch
          %149 = sbr.rel (%p147) target = $region16
        $region15: #{tpu_custom_call.1} parent=11 // pred_region
          %s151 = ssub.s32 128, 128
          %152 = vsyncadd [#allocation7], %s151
          %s154 = sshll.u32 [#allocation6], 4
          %s155 = int_to_ptr.vmem [resolvable:$true] %s154
          %157 = dma.hbm_to_vmem [thread:$0]  %s1, 128, %s155, [#allocation7]
        $region16: #{tpu_custom_call.1} parent=11 // pred_fallthru
          _
        // Predicated region
        $region17: #{tpu_custom_call.1} parent=11 // pred_check
          %p158 = pneg %p85
        $region18: #{tpu_custom_call.1} parent=11 // pred_check_branch
          %160 = sbr.rel (%p158) target = $region20
        $region19: #{tpu_custom_call.1} parent=11 // pred_region
          %s162 = ssub.s32 1024, 1024
          %163 = vsyncadd [#allocation7], %s162
          %s164 = sshll.u32 [#allocation8], 4
          %s165 = int_to_ptr.vmem [resolvable:$true] %s164
          %170 = dma.hbm_to_vmem [thread:$0]  %s2, 1024, %s165, [#allocation7], 256, 256, 16
        $region20: #{tpu_custom_call.1} parent=11 // pred_fallthru
          _
        // Predicated region
        $region21: #{tpu_custom_call.1} parent=11 // pred_check
          %p171 = pneg %p106
        $region22: #{tpu_custom_call.1} parent=11 // pred_check_branch
          %173 = sbr.rel (%p171) target = $region24
        $region23: #{tpu_custom_call.1} parent=11 // pred_region
          _
        $region24: #{tpu_custom_call.1} parent=11 // pred_fallthru
          _
      $region12: #{tpu_custom_call.1} parent=5 // pred_fallthru
        _
      %p174 = scmp.lt.s32.totalorder %s17, 2
      // Predicated region
      $region25: #{tpu_custom_call.1} parent=5 // pred_check
        %p175 = pneg %p174
      $region26: #{tpu_custom_call.1} parent=5 // pred_check_branch
        %177 = sbr.rel (%p175) target = $region28
      $region27: #{tpu_custom_call.1} parent=5 // pred_region
        // Predicated region
        $region29: #{tpu_custom_call.1} parent=27 // pred_check
          %p178 = pneg %p37
        $region30: #{tpu_custom_call.1} parent=27 // pred_check_branch
          %180 = sbr.rel (%p178) target = $region32
        $region31: #{tpu_custom_call.1} parent=27 // pred_region
          %s181 = sand.u32 %s27, 1
          %s182 = scalar_lea.sflag [#allocation4], %s181
          %s183 = sand.u32 %s27, 1
          %s184 = smul.addr %s183, 64
          %s185 = scalar_lea.vmem [#allocation3], %s184
          %s186 = smul.u32 8, %s17
          %s188 = ssub.s32 1024, 1024
          %189 = vsyncadd %s182, %s188
          %s190 = smul.addr %s186, 128
          %s191 = scalar_lea.hbm %s0, %s190
          %s192 = sshll.u32 %s185, 4
          %s193 = int_to_ptr.vmem [resolvable:$true] %s192
          %198 = dma.hbm_to_vmem [thread:$0]  %s191, 1024, %s193, %s182, 128, 128, 8
        $region32: #{tpu_custom_call.1} parent=27 // pred_fallthru
          _
      $region28: #{tpu_custom_call.1} parent=5 // pred_fallthru
        _
      %p199 = scmp.le.s32.totalorder 1, %s17
      %p200 = scmp.lt.s32.totalorder %s17, 3
      %p201 = pnand %p199, %p200
      %p202 = pneg %p201
      // Predicated region
      $region33: #{tpu_custom_call.1} parent=5 // pred_check
        _
      $region34: #{tpu_custom_call.1} parent=5 // pred_check_branch
        %204 = sbr.rel (%p201) target = $region36
      $region35: #{tpu_custom_call.1} parent=5 // pred_region
        %s205 = ssub.s32 %s17, 1
        %s206 = sand.u32 %s30, 1
        %s207 = scalar_lea.sflag [#allocation4], %s206
        %s208 = sand.u32 %s30, 1
        %s209 = smul.addr %s208, 64
        %s210 = scalar_lea.vmem [#allocation3], %s209
        // Predicated region
        $region37: #{tpu_custom_call.1} parent=35 // pred_check
          %p211 = pneg %p43
        $region38: #{tpu_custom_call.1} parent=35 // pred_check_branch
          %213 = sbr.rel (%p211) target = $region40
        $region39: #{tpu_custom_call.1} parent=35 // pred_region
          %214 = dma.done %s207, 1024
        $region40: #{tpu_custom_call.1} parent=35 // pred_fallthru
          _
        // Predicated region
        $region41: #{tpu_custom_call.1} parent=35 // pred_check
          %p215 = pneg %p64
        $region42: #{tpu_custom_call.1} parent=35 // pred_check_branch
          %217 = sbr.rel (%p215) target = $region44
        $region43: #{tpu_custom_call.1} parent=35 // pred_region
          %218 = dma.done [#allocation7], 128
        $region44: #{tpu_custom_call.1} parent=35 // pred_fallthru
          _
        // Predicated region
        $region45: #{tpu_custom_call.1} parent=35 // pred_check
          %p219 = pneg %p85
        $region46: #{tpu_custom_call.1} parent=35 // pred_check_branch
          %221 = sbr.rel (%p219) target = $region48
        $region47: #{tpu_custom_call.1} parent=35 // pred_region
          %222 = dma.done [#allocation7], 1024
        $region48: #{tpu_custom_call.1} parent=35 // pred_fallthru
          _
        %s223 = sand.u32 %s30, 1
        %s224 = scalar_lea.sflag [#allocation4], %s223
        %s225 = sand.u32 %s30, 1
        %s226 = smul.addr %s225, 64
        %s227 = scalar_lea.vmem [#allocation3], %s226
        %p228 = pneg %p43
        %p229 = pneg %p40
        %p230 = pneg %p64
        %p231 = pneg %p61
        %p232 = pneg %p85
        %p233 = pneg %p82
        %p234 = pneg %p106
        %p235 = pneg %p103
        %p236 = pneg %p132
        %p237 = pneg %p129
        %s238 = sand.u32 %s119, 1
        %s239 = scalar_lea.sflag [#allocation5], %s238
        %s240 = sand.u32 %s119, 1
        %s241 = smul.addr %s240, 64
        %s242 = scalar_lea.vmem [#allocation9], %s241
        %s243 = smul.u32 8, %s22
        %p244 = scmp.eq.s32.totalorder %s22, 0
        // Predicated region
        $region49: #{tpu_custom_call.1} parent=35 // pred_check
          %p245 = pneg %p244
        $region50: #{tpu_custom_call.1} parent=35 // pred_check_branch
          %247 = sbr.rel (%p245) target = $region52
        $region51: #{tpu_custom_call.1} parent=35 // pred_region
          %v248 = vld [vmem:[#allocation6] sm:$0xff]
          %vm249 = vcmask 261120
          %250 = vst.msk [vmem:[#allocation2] sm:$0xff] %vm249, %v248
        $region52: #{tpu_custom_call.1} parent=35 // pred_fallthru
          _
        %v251 = vld [vmem:[#allocation8] sm:$0xff]
        %v252 = vld [vmem:[#allocation8 + $0x8] sm:$0xff]
        %v253 = vld [vmem:[#allocation8 + $0x10] sm:$0xff]
        %v254 = vld [vmem:[#allocation8 + $0x18] sm:$0xff]
        %v255 = vld [vmem:[#allocation8 + $0x20] sm:$0xff]
        %v256 = vld [vmem:[#allocation8 + $0x28] sm:$0xff]
        %v257 = vld [vmem:[#allocation8 + $0x30] sm:$0xff]
        %v258 = vld [vmem:[#allocation8 + $0x38] sm:$0xff]
        %v259 = vld [vmem:[#allocation2] sm:$0xff]
        %v260 = vld [vmem:[%s210] sm:$0xff]
        %v261 = vadd.f32 %v260, %v259
        %v262 = vtanh.pop %v261
        %vm263 = vcmask 261120
        %v265 = vsel %vm263, %v262, 0
        %267 = vmatprep.subr.mxu0 %v252
        %268 = vmatpush1.msra.mxu0 %v251
        %269 = vmatprep.subr.mxu0 %v254
        %270 = vmatpush1.msra.mxu0 %v253
        %271 = vmatprep.subr.mxu0 %v256
        %272 = vmatpush1.msra.mxu0 %v255
        %273 = vmatprep.subr.mxu0 %v258
        %274 = vmatpush1.msra.mxu0 %v257
        %275 = vmatprep.subr.mxu0 0.0
        %276 = vmatpush1.msra.mxu0 0.0
        %277 = vmatprep.subr.mxu0 0.0
        %278 = vmatpush1.msra.mxu0 0.0
        %279 = vmatprep.subr.mxu0 0.0
        %280 = vmatpush1.msra.mxu0 0.0
        %281 = vmatprep.subr.mxu0 0.0
        %282 = vmatpush1.msra.mxu0 0.0
        %283 = vmatprep.subr.mxu0 0.0
        %284 = vmatpush1.msra.mxu0 0.0
        %285 = vmatprep.subr.mxu0 0.0
        %286 = vmatpush1.msra.mxu0 0.0
        %287 = vmatprep.subr.mxu0 0.0
        %288 = vmatpush1.msra.mxu0 0.0
        %289 = vmatprep.subr.mxu0 0.0
        %290 = vmatpush1.msra.mxu0 0.0
        %291 = vmatprep.subr.mxu0 0.0
        %292 = vmatpush1.msra.mxu0 0.0
        %293 = vmatprep.subr.mxu0 0.0
        %294 = vmatpush1.msra.mxu0 0.0
        %295 = vmatprep.subr.mxu0 0.0
        %296 = vmatpush1.msra.mxu0 0.0
        %297 = vmatprep.subr.mxu0 0.0
        %298 = vmatpush1.msra.mxu0 0.0
        %299 = vmatprep.subr.mxu0 0.0
        %300 = vmatpush1.msra.mxu0 0.0
        %301 = vmatprep.subr.mxu0 0.0
        %302 = vmatpush1.msra.mxu0 0.0
        %303 = vmatprep.subr.mxu0 0.0
        %304 = vmatpush1.msra.mxu0 0.0
        %305 = vmatprep.subr.mxu0 0.0
        %306 = vmatpush1.msra.mxu0 0.0
        %307 = vmatprep.subr.mxu0 0.0
        %308 = vmatpush1.msra.mxu0 0.0
        %309 = vmatprep.subr.mxu0 0.0
        %310 = vmatpush1.msra.mxu0 0.0
        %311 = vmatprep.subr.mxu0 0.0
        %312 = vmatpush1.msra.mxu0 0.0
        %313 = vmatprep.subr.mxu0 0.0
        %314 = vmatpush1.msra.mxu0 0.0
        %315 = vmatprep.subr.mxu0 0.0
        %316 = vmatpush1.msra.mxu0 0.0
        %317 = vmatprep.subr.mxu0 0.0
        %318 = vmatpush1.msra.mxu0 0.0
        %319 = vmatprep.subr.mxu0 0.0
        %320 = vmatpush1.msra.mxu0 0.0
        %321 = vmatprep.subr.mxu0 0.0
        %322 = vmatpush1.msra.mxu0 0.0
        %323 = vmatprep.subr.mxu0 0.0
        %324 = vmatpush1.msra.mxu0 0.0
        %325 = vmatprep.subr.mxu0 0.0
        %326 = vmatpush1.msra.mxu0 0.0
        %327 = vmatprep.subr.mxu0 0.0
        %328 = vmatpush1.msra.mxu0 0.0
        %329 = vmatprep.subr.mxu0 0.0
        %330 = vmatpush1.msra.mxu0 0.0
        %331 = vmatprep.mubr.f32.mxu0 0.0
        %332 = vmatmul.mubr.f32.gmra.mrb[0].mxu0 %v265
        %v333 = vpop.f32.mrb[0].mxu0
        %v334 = vadd.f32 0.0, %v333
        %v335 = vpop.f32.mrb[0].mxu0
        %v336 = vadd.f32 0.0, %v335
        %337 = vdwg.mxu0
        %s338 = scalar_lea.vmem %s210, 8 [#allocation3]
        %v339 = vld [vmem:[%s338] sm:$0xff]
        %v340 = vadd.f32 %v339, %v336
        %v341 = vtanh.pop %v340
        %v343 = vsel %vm263, %v341, 0
        %345 = vmatprep.subr.mxu0 %v252
        %346 = vmatpush1.msra.mxu0 %v251
        %347 = vmatprep.subr.mxu0 %v254
        %348 = vmatpush1.msra.mxu0 %v253
        %349 = vmatprep.subr.mxu0 %v256
        %350 = vmatpush1.msra.mxu0 %v255
        %351 = vmatprep.subr.mxu0 %v258
        %352 = vmatpush1.msra.mxu0 %v257
        %353 = vmatprep.subr.mxu0 0.0
        %354 = vmatpush1.msra.mxu0 0.0
        %355 = vmatprep.subr.mxu0 0.0
        %356 = vmatpush1.msra.mxu0 0.0
        %357 = vmatprep.subr.mxu0 0.0
        %358 = vmatpush1.msra.mxu0 0.0
        %359 = vmatprep.subr.mxu0 0.0
        %360 = vmatpush1.msra.mxu0 0.0
        %361 = vmatprep.subr.mxu0 0.0
        %362 = vmatpush1.msra.mxu0 0.0
        %363 = vmatprep.subr.mxu0 0.0
        %364 = vmatpush1.msra.mxu0 0.0
        %365 = vmatprep.subr.mxu0 0.0
        %366 = vmatpush1.msra.mxu0 0.0
        %367 = vmatprep.subr.mxu0 0.0
        %368 = vmatpush1.msra.mxu0 0.0
        %369 = vmatprep.subr.mxu0 0.0
        %370 = vmatpush1.msra.mxu0 0.0
        %371 = vmatprep.subr.mxu0 0.0
        %372 = vmatpush1.msra.mxu0 0.0
        %373 = vmatprep.subr.mxu0 0.0
        %374 = vmatpush1.msra.mxu0 0.0
        %375 = vmatprep.subr.mxu0 0.0
        %376 = vmatpush1.msra.mxu0 0.0
        %377 = vmatprep.subr.mxu0 0.0
        %378 = vmatpush1.msra.mxu0 0.0
        %379 = vmatprep.subr.mxu0 0.0
        %380 = vmatpush1.msra.mxu0 0.0
        %381 = vmatprep.subr.mxu0 0.0
        %382 = vmatpush1.msra.mxu0 0.0
        %383 = vmatprep.subr.mxu0 0.0
        %384 = vmatpush1.msra.mxu0 0.0
        %385 = vmatprep.subr.mxu0 0.0
        %386 = vmatpush1.msra.mxu0 0.0
        %387 = vmatprep.subr.mxu0 0.0
        %388 = vmatpush1.msra.mxu0 0.0
        %389 = vmatprep.subr.mxu0 0.0
        %390 = vmatpush1.msra.mxu0 0.0
        %391 = vmatprep.subr.mxu0 0.0
        %392 = vmatpush1.msra.mxu0 0.0
        %393 = vmatprep.subr.mxu0 0.0
        %394 = vmatpush1.msra.mxu0 0.0
        %395 = vmatprep.subr.mxu0 0.0
        %396 = vmatpush1.msra.mxu0 0.0
        %397 = vmatprep.subr.mxu0 0.0
        %398 = vmatpush1.msra.mxu0 0.0
        %399 = vmatprep.subr.mxu0 0.0
        %400 = vmatpush1.msra.mxu0 0.0
        %401 = vmatprep.subr.mxu0 0.0
        %402 = vmatpush1.msra.mxu0 0.0
        %403 = vmatprep.subr.mxu0 0.0
        %404 = vmatpush1.msra.mxu0 0.0
        %405 = vmatprep.subr.mxu0 0.0
        %406 = vmatpush1.msra.mxu0 0.0
        %407 = vmatprep.subr.mxu0 0.0
        %408 = vmatpush1.msra.mxu0 0.0
        %409 = vmatprep.mubr.f32.mxu0 0.0
        %410 = vmatmul.mubr.f32.gmra.mrb[0].mxu0 %v343
        %v411 = vpop.f32.mrb[0].mxu0
        %v412 = vadd.f32 0.0, %v411
        %v413 = vpop.f32.mrb[0].mxu0
        %v414 = vadd.f32 0.0, %v413
        %415 = vdwg.mxu0
        %s416 = scalar_lea.vmem %s210, 16 [#allocation3]
        %v417 = vld [vmem:[%s416] sm:$0xff]
        %v418 = vadd.f32 %v417, %v414
        %v419 = vtanh.pop %v418
        %v421 = vsel %vm263, %v419, 0
        %423 = vmatprep.subr.mxu0 %v252
        %424 = vmatpush1.msra.mxu0 %v251
        %425 = vmatprep.subr.mxu0 %v254
        %426 = vmatpush1.msra.mxu0 %v253
        %427 = vmatprep.subr.mxu0 %v256
        %428 = vmatpush1.msra.mxu0 %v255
        %429 = vmatprep.subr.mxu0 %v258
        %430 = vmatpush1.msra.mxu0 %v257
        %431 = vmatprep.subr.mxu0 0.0
        %432 = vmatpush1.msra.mxu0 0.0
        %433 = vmatprep.subr.mxu0 0.0
        %434 = vmatpush1.msra.mxu0 0.0
        %435 = vmatprep.subr.mxu0 0.0
        %436 = vmatpush1.msra.mxu0 0.0
        %437 = vmatprep.subr.mxu0 0.0
        %438 = vmatpush1.msra.mxu0 0.0
        %439 = vmatprep.subr.mxu0 0.0
        %440 = vmatpush1.msra.mxu0 0.0
        %441 = vmatprep.subr.mxu0 0.0
        %442 = vmatpush1.msra.mxu0 0.0
        %443 = vmatprep.subr.mxu0 0.0
        %444 = vmatpush1.msra.mxu0 0.0
        %445 = vmatprep.subr.mxu0 0.0
        %446 = vmatpush1.msra.mxu0 0.0
        %447 = vmatprep.subr.mxu0 0.0
        %448 = vmatpush1.msra.mxu0 0.0
        %449 = vmatprep.subr.mxu0 0.0
        %450 = vmatpush1.msra.mxu0 0.0
        %451 = vmatprep.subr.mxu0 0.0
        %452 = vmatpush1.msra.mxu0 0.0
        %453 = vmatprep.subr.mxu0 0.0
        %454 = vmatpush1.msra.mxu0 0.0
        %455 = vmatprep.subr.mxu0 0.0
        %456 = vmatpush1.msra.mxu0 0.0
        %457 = vmatprep.subr.mxu0 0.0
        %458 = vmatpush1.msra.mxu0 0.0
        %459 = vmatprep.subr.mxu0 0.0
        %460 = vmatpush1.msra.mxu0 0.0
        %461 = vmatprep.subr.mxu0 0.0
        %462 = vmatpush1.msra.mxu0 0.0
        %463 = vmatprep.subr.mxu0 0.0
        %464 = vmatpush1.msra.mxu0 0.0
        %465 = vmatprep.subr.mxu0 0.0
        %466 = vmatpush1.msra.mxu0 0.0
        %467 = vmatprep.subr.mxu0 0.0
        %468 = vmatpush1.msra.mxu0 0.0
        %469 = vmatprep.subr.mxu0 0.0
        %470 = vmatpush1.msra.mxu0 0.0
        %471 = vmatprep.subr.mxu0 0.0
        %472 = vmatpush1.msra.mxu0 0.0
        %473 = vmatprep.subr.mxu0 0.0
        %474 = vmatpush1.msra.mxu0 0.0
        %475 = vmatprep.subr.mxu0 0.0
        %476 = vmatpush1.msra.mxu0 0.0
        %477 = vmatprep.subr.mxu0 0.0
        %478 = vmatpush1.msra.mxu0 0.0
        %479 = vmatprep.subr.mxu0 0.0
        %480 = vmatpush1.msra.mxu0 0.0
        %481 = vmatprep.subr.mxu0 0.0
        %482 = vmatpush1.msra.mxu0 0.0
        %483 = vmatprep.subr.mxu0 0.0
        %484 = vmatpush1.msra.mxu0 0.0
        %485 = vmatprep.subr.mxu0 0.0
        %486 = vmatpush1.msra.mxu0 0.0
        %487 = vmatprep.mubr.f32.mxu0 0.0
        %488 = vmatmul.mubr.f32.gmra.mrb[0].mxu0 %v421
        %v489 = vpop.f32.mrb[0].mxu0
        %v490 = vadd.f32 0.0, %v489
        %v491 = vpop.f32.mrb[0].mxu0
        %v492 = vadd.f32 0.0, %v491
        %493 = vdwg.mxu0
        %s494 = scalar_lea.vmem %s210, 24 [#allocation3]
        %v495 = vld [vmem:[%s494] sm:$0xff]
        %v496 = vadd.f32 %v495, %v492
        %v497 = vtanh.pop %v496
        %v499 = vsel %vm263, %v497, 0
        %501 = vmatprep.subr.mxu0 %v252
        %502 = vmatpush1.msra.mxu0 %v251
        %503 = vmatprep.subr.mxu0 %v254
        %504 = vmatpush1.msra.mxu0 %v253
        %505 = vmatprep.subr.mxu0 %v256
        %506 = vmatpush1.msra.mxu0 %v255
        %507 = vmatprep.subr.mxu0 %v258
        %508 = vmatpush1.msra.mxu0 %v257
        %509 = vmatprep.subr.mxu0 0.0
        %510 = vmatpush1.msra.mxu0 0.0
        %511 = vmatprep.subr.mxu0 0.0
        %512 = vmatpush1.msra.mxu0 0.0
        %513 = vmatprep.subr.mxu0 0.0
        %514 = vmatpush1.msra.mxu0 0.0
        %515 = vmatprep.subr.mxu0 0.0
        %516 = vmatpush1.msra.mxu0 0.0
        %517 = vmatprep.subr.mxu0 0.0
        %518 = vmatpush1.msra.mxu0 0.0
        %519 = vmatprep.subr.mxu0 0.0
        %520 = vmatpush1.msra.mxu0 0.0
        %521 = vmatprep.subr.mxu0 0.0
        %522 = vmatpush1.msra.mxu0 0.0
        %523 = vmatprep.subr.mxu0 0.0
        %524 = vmatpush1.msra.mxu0 0.0
        %525 = vmatprep.subr.mxu0 0.0
        %526 = vmatpush1.msra.mxu0 0.0
        %527 = vmatprep.subr.mxu0 0.0
        %528 = vmatpush1.msra.mxu0 0.0
        %529 = vmatprep.subr.mxu0 0.0
        %530 = vmatpush1.msra.mxu0 0.0
        %531 = vmatprep.subr.mxu0 0.0
        %532 = vmatpush1.msra.mxu0 0.0
        %533 = vmatprep.subr.mxu0 0.0
        %534 = vmatpush1.msra.mxu0 0.0
        %535 = vmatprep.subr.mxu0 0.0
        %536 = vmatpush1.msra.mxu0 0.0
        %537 = vmatprep.subr.mxu0 0.0
        %538 = vmatpush1.msra.mxu0 0.0
        %539 = vmatprep.subr.mxu0 0.0
        %540 = vmatpush1.msra.mxu0 0.0
        %541 = vmatprep.subr.mxu0 0.0
        %542 = vmatpush1.msra.mxu0 0.0
        %543 = vmatprep.subr.mxu0 0.0
        %544 = vmatpush1.msra.mxu0 0.0
        %545 = vmatprep.subr.mxu0 0.0
        %546 = vmatpush1.msra.mxu0 0.0
        %547 = vmatprep.subr.mxu0 0.0
        %548 = vmatpush1.msra.mxu0 0.0
        %549 = vmatprep.subr.mxu0 0.0
        %550 = vmatpush1.msra.mxu0 0.0
        %551 = vmatprep.subr.mxu0 0.0
        %552 = vmatpush1.msra.mxu0 0.0
        %553 = vmatprep.subr.mxu0 0.0
        %554 = vmatpush1.msra.mxu0 0.0
        %555 = vmatprep.subr.mxu0 0.0
        %556 = vmatpush1.msra.mxu0 0.0
        %557 = vmatprep.subr.mxu0 0.0
        %558 = vmatpush1.msra.mxu0 0.0
        %559 = vmatprep.subr.mxu0 0.0
        %560 = vmatpush1.msra.mxu0 0.0
        %561 = vmatprep.subr.mxu0 0.0
        %562 = vmatpush1.msra.mxu0 0.0
        %563 = vmatprep.subr.mxu0 0.0
        %564 = vmatpush1.msra.mxu0 0.0
        %565 = vmatprep.mubr.f32.mxu0 0.0
        %566 = vmatmul.mubr.f32.gmra.mrb[0].mxu0 %v499
        %v567 = vpop.f32.mrb[0].mxu0
        %v568 = vadd.f32 0.0, %v567
        %v569 = vpop.f32.mrb[0].mxu0
        %v570 = vadd.f32 0.0, %v569
        %571 = vdwg.mxu0
        %s572 = scalar_lea.vmem %s210, 32 [#allocation3]
        %v573 = vld [vmem:[%s572] sm:$0xff]
        %v574 = vadd.f32 %v573, %v570
        %v575 = vtanh.pop %v574
        %v577 = vsel %vm263, %v575, 0
        %579 = vmatprep.subr.mxu0 %v252
        %580 = vmatpush1.msra.mxu0 %v251
        %581 = vmatprep.subr.mxu0 %v254
        %582 = vmatpush1.msra.mxu0 %v253
        %583 = vmatprep.subr.mxu0 %v256
        %584 = vmatpush1.msra.mxu0 %v255
        %585 = vmatprep.subr.mxu0 %v258
        %586 = vmatpush1.msra.mxu0 %v257
        %587 = vmatprep.subr.mxu0 0.0
        %588 = vmatpush1.msra.mxu0 0.0
        %589 = vmatprep.subr.mxu0 0.0
        %590 = vmatpush1.msra.mxu0 0.0
        %591 = vmatprep.subr.mxu0 0.0
        %592 = vmatpush1.msra.mxu0 0.0
        %593 = vmatprep.subr.mxu0 0.0
        %594 = vmatpush1.msra.mxu0 0.0
        %595 = vmatprep.subr.mxu0 0.0
        %596 = vmatpush1.msra.mxu0 0.0
        %597 = vmatprep.subr.mxu0 0.0
        %598 = vmatpush1.msra.mxu0 0.0
        %599 = vmatprep.subr.mxu0 0.0
        %600 = vmatpush1.msra.mxu0 0.0
        %601 = vmatprep.subr.mxu0 0.0
        %602 = vmatpush1.msra.mxu0 0.0
        %603 = vmatprep.subr.mxu0 0.0
        %604 = vmatpush1.msra.mxu0 0.0
        %605 = vmatprep.subr.mxu0 0.0
        %606 = vmatpush1.msra.mxu0 0.0
        %607 = vmatprep.subr.mxu0 0.0
        %608 = vmatpush1.msra.mxu0 0.0
        %609 = vmatprep.subr.mxu0 0.0
        %610 = vmatpush1.msra.mxu0 0.0
        %611 = vmatprep.subr.mxu0 0.0
        %612 = vmatpush1.msra.mxu0 0.0
        %613 = vmatprep.subr.mxu0 0.0
        %614 = vmatpush1.msra.mxu0 0.0
        %615 = vmatprep.subr.mxu0 0.0
        %616 = vmatpush1.msra.mxu0 0.0
        %617 = vmatprep.subr.mxu0 0.0
        %618 = vmatpush1.msra.mxu0 0.0
        %619 = vmatprep.subr.mxu0 0.0
        %620 = vmatpush1.msra.mxu0 0.0
        %621 = vmatprep.subr.mxu0 0.0
        %622 = vmatpush1.msra.mxu0 0.0
        %623 = vmatprep.subr.mxu0 0.0
        %624 = vmatpush1.msra.mxu0 0.0
        %625 = vmatprep.subr.mxu0 0.0
        %626 = vmatpush1.msra.mxu0 0.0
        %627 = vmatprep.subr.mxu0 0.0
        %628 = vmatpush1.msra.mxu0 0.0
        %629 = vmatprep.subr.mxu0 0.0
        %630 = vmatpush1.msra.mxu0 0.0
        %631 = vmatprep.subr.mxu0 0.0
        %632 = vmatpush1.msra.mxu0 0.0
        %633 = vmatprep.subr.mxu0 0.0
        %634 = vmatpush1.msra.mxu0 0.0
        %635 = vmatprep.subr.mxu0 0.0
        %636 = vmatpush1.msra.mxu0 0.0
        %637 = vmatprep.subr.mxu0 0.0
        %638 = vmatpush1.msra.mxu0 0.0
        %639 = vmatprep.subr.mxu0 0.0
        %640 = vmatpush1.msra.mxu0 0.0
        %641 = vmatprep.subr.mxu0 0.0
        %642 = vmatpush1.msra.mxu0 0.0
        %643 = vmatprep.mubr.f32.mxu0 0.0
        %644 = vmatmul.mubr.f32.gmra.mrb[0].mxu0 %v577
        %v645 = vpop.f32.mrb[0].mxu0
        %v646 = vadd.f32 0.0, %v645
        %v647 = vpop.f32.mrb[0].mxu0
        %v648 = vadd.f32 0.0, %v647
        %649 = vdwg.mxu0
        %s650 = scalar_lea.vmem %s210, 40 [#allocation3]
        %v651 = vld [vmem:[%s650] sm:$0xff]
        %v652 = vadd.f32 %v651, %v648
        %v653 = vtanh.pop %v652
        %v655 = vsel %vm263, %v653, 0
        %657 = vmatprep.subr.mxu0 %v252
        %658 = vmatpush1.msra.mxu0 %v251
        %659 = vmatprep.subr.mxu0 %v254
        %660 = vmatpush1.msra.mxu0 %v253
        %661 = vmatprep.subr.mxu0 %v256
        %662 = vmatpush1.msra.mxu0 %v255
        %663 = vmatprep.subr.mxu0 %v258
        %664 = vmatpush1.msra.mxu0 %v257
        %665 = vmatprep.subr.mxu0 0.0
        %666 = vmatpush1.msra.mxu0 0.0
        %667 = vmatprep.subr.mxu0 0.0
        %668 = vmatpush1.msra.mxu0 0.0
        %669 = vmatprep.subr.mxu0 0.0
        %670 = vmatpush1.msra.mxu0 0.0
        %671 = vmatprep.subr.mxu0 0.0
        %672 = vmatpush1.msra.mxu0 0.0
        %673 = vmatprep.subr.mxu0 0.0
        %674 = vmatpush1.msra.mxu0 0.0
        %675 = vmatprep.subr.mxu0 0.0
        %676 = vmatpush1.msra.mxu0 0.0
        %677 = vmatprep.subr.mxu0 0.0
        %678 = vmatpush1.msra.mxu0 0.0
        %679 = vmatprep.subr.mxu0 0.0
        %680 = vmatpush1.msra.mxu0 0.0
        %681 = vmatprep.subr.mxu0 0.0
        %682 = vmatpush1.msra.mxu0 0.0
        %683 = vmatprep.subr.mxu0 0.0
        %684 = vmatpush1.msra.mxu0 0.0
        %685 = vmatprep.subr.mxu0 0.0
        %686 = vmatpush1.msra.mxu0 0.0
        %687 = vmatprep.subr.mxu0 0.0
        %688 = vmatpush1.msra.mxu0 0.0
        %689 = vmatprep.subr.mxu0 0.0
        %690 = vmatpush1.msra.mxu0 0.0
        %691 = vmatprep.subr.mxu0 0.0
        %692 = vmatpush1.msra.mxu0 0.0
        %693 = vmatprep.subr.mxu0 0.0
        %694 = vmatpush1.msra.mxu0 0.0
        %695 = vmatprep.subr.mxu0 0.0
        %696 = vmatpush1.msra.mxu0 0.0
        %697 = vmatprep.subr.mxu0 0.0
        %698 = vmatpush1.msra.mxu0 0.0
        %699 = vmatprep.subr.mxu0 0.0
        %700 = vmatpush1.msra.mxu0 0.0
        %701 = vmatprep.subr.mxu0 0.0
        %702 = vmatpush1.msra.mxu0 0.0
        %703 = vmatprep.subr.mxu0 0.0
        %704 = vmatpush1.msra.mxu0 0.0
        %705 = vmatprep.subr.mxu0 0.0
        %706 = vmatpush1.msra.mxu0 0.0
        %707 = vmatprep.subr.mxu0 0.0
        %708 = vmatpush1.msra.mxu0 0.0
        %709 = vmatprep.subr.mxu0 0.0
        %710 = vmatpush1.msra.mxu0 0.0
        %711 = vmatprep.subr.mxu0 0.0
        %712 = vmatpush1.msra.mxu0 0.0
        %713 = vmatprep.subr.mxu0 0.0
        %714 = vmatpush1.msra.mxu0 0.0
        %715 = vmatprep.subr.mxu0 0.0
        %716 = vmatpush1.msra.mxu0 0.0
        %717 = vmatprep.subr.mxu0 0.0
        %718 = vmatpush1.msra.mxu0 0.0
        %719 = vmatprep.subr.mxu0 0.0
        %720 = vmatpush1.msra.mxu0 0.0
        %721 = vmatprep.mubr.f32.mxu0 0.0
        %722 = vmatmul.mubr.f32.gmra.mrb[0].mxu0 %v655
        %v723 = vpop.f32.mrb[0].mxu0
        %v724 = vadd.f32 0.0, %v723
        %v725 = vpop.f32.mrb[0].mxu0
        %v726 = vadd.f32 0.0, %v725
        %727 = vdwg.mxu0
        %s728 = scalar_lea.vmem %s210, 48 [#allocation3]
        %v729 = vld [vmem:[%s728] sm:$0xff]
        %v730 = vadd.f32 %v729, %v726
        %v731 = vtanh.pop %v730
        %v733 = vsel %vm263, %v731, 0
        %735 = vmatprep.subr.mxu0 %v252
        %736 = vmatpush1.msra.mxu0 %v251
        %737 = vmatprep.subr.mxu0 %v254
        %738 = vmatpush1.msra.mxu0 %v253
        %739 = vmatprep.subr.mxu0 %v256
        %740 = vmatpush1.msra.mxu0 %v255
        %741 = vmatprep.subr.mxu0 %v258
        %742 = vmatpush1.msra.mxu0 %v257
        %743 = vmatprep.subr.mxu0 0.0
        %744 = vmatpush1.msra.mxu0 0.0
        %745 = vmatprep.subr.mxu0 0.0
        %746 = vmatpush1.msra.mxu0 0.0
        %747 = vmatprep.subr.mxu0 0.0
        %748 = vmatpush1.msra.mxu0 0.0
        %749 = vmatprep.subr.mxu0 0.0
        %750 = vmatpush1.msra.mxu0 0.0
        %751 = vmatprep.subr.mxu0 0.0
        %752 = vmatpush1.msra.mxu0 0.0
        %753 = vmatprep.subr.mxu0 0.0
        %754 = vmatpush1.msra.mxu0 0.0
        %755 = vmatprep.subr.mxu0 0.0
        %756 = vmatpush1.msra.mxu0 0.0
        %757 = vmatprep.subr.mxu0 0.0
        %758 = vmatpush1.msra.mxu0 0.0
        %759 = vmatprep.subr.mxu0 0.0
        %760 = vmatpush1.msra.mxu0 0.0
        %761 = vmatprep.subr.mxu0 0.0
        %762 = vmatpush1.msra.mxu0 0.0
        %763 = vmatprep.subr.mxu0 0.0
        %764 = vmatpush1.msra.mxu0 0.0
        %765 = vmatprep.subr.mxu0 0.0
        %766 = vmatpush1.msra.mxu0 0.0
        %767 = vmatprep.subr.mxu0 0.0
        %768 = vmatpush1.msra.mxu0 0.0
        %769 = vmatprep.subr.mxu0 0.0
        %770 = vmatpush1.msra.mxu0 0.0
        %771 = vmatprep.subr.mxu0 0.0
        %772 = vmatpush1.msra.mxu0 0.0
        %773 = vmatprep.subr.mxu0 0.0
        %774 = vmatpush1.msra.mxu0 0.0
        %775 = vmatprep.subr.mxu0 0.0
        %776 = vmatpush1.msra.mxu0 0.0
        %777 = vmatprep.subr.mxu0 0.0
        %778 = vmatpush1.msra.mxu0 0.0
        %779 = vmatprep.subr.mxu0 0.0
        %780 = vmatpush1.msra.mxu0 0.0
        %781 = vmatprep.subr.mxu0 0.0
        %782 = vmatpush1.msra.mxu0 0.0
        %783 = vmatprep.subr.mxu0 0.0
        %784 = vmatpush1.msra.mxu0 0.0
        %785 = vmatprep.subr.mxu0 0.0
        %786 = vmatpush1.msra.mxu0 0.0
        %787 = vmatprep.subr.mxu0 0.0
        %788 = vmatpush1.msra.mxu0 0.0
        %789 = vmatprep.subr.mxu0 0.0
        %790 = vmatpush1.msra.mxu0 0.0
        %791 = vmatprep.subr.mxu0 0.0
        %792 = vmatpush1.msra.mxu0 0.0
        %793 = vmatprep.subr.mxu0 0.0
        %794 = vmatpush1.msra.mxu0 0.0
        %795 = vmatprep.subr.mxu0 0.0
        %796 = vmatpush1.msra.mxu0 0.0
        %797 = vmatprep.subr.mxu0 0.0
        %798 = vmatpush1.msra.mxu0 0.0
        %799 = vmatprep.mubr.f32.mxu0 0.0
        %800 = vmatmul.mubr.f32.gmra.mrb[0].mxu0 %v733
        %v801 = vpop.f32.mrb[0].mxu0
        %v802 = vadd.f32 0.0, %v801
        %v803 = vpop.f32.mrb[0].mxu0
        %v804 = vadd.f32 0.0, %v803
        %805 = vdwg.mxu0
        %s806 = scalar_lea.vmem %s210, 56 [#allocation3]
        %v807 = vld [vmem:[%s806] sm:$0xff]
        %v808 = vadd.f32 %v807, %v804
        %v809 = vtanh.pop %v808
        %v811 = vsel %vm263, %v809, 0
        %813 = vmatprep.subr.mxu0 %v252
        %814 = vmatpush1.msra.mxu0 %v251
        %815 = vmatprep.subr.mxu0 %v254
        %816 = vmatpush1.msra.mxu0 %v253
        %817 = vmatprep.subr.mxu0 %v256
        %818 = vmatpush1.msra.mxu0 %v255
        %819 = vmatprep.subr.mxu0 %v258
        %820 = vmatpush1.msra.mxu0 %v257
        %821 = vmatprep.subr.mxu0 0.0
        %822 = vmatpush1.msra.mxu0 0.0
        %823 = vmatprep.subr.mxu0 0.0
        %824 = vmatpush1.msra.mxu0 0.0
        %825 = vmatprep.subr.mxu0 0.0
        %826 = vmatpush1.msra.mxu0 0.0
        %827 = vmatprep.subr.mxu0 0.0
        %828 = vmatpush1.msra.mxu0 0.0
        %829 = vmatprep.subr.mxu0 0.0
        %830 = vmatpush1.msra.mxu0 0.0
        %831 = vmatprep.subr.mxu0 0.0
        %832 = vmatpush1.msra.mxu0 0.0
        %833 = vmatprep.subr.mxu0 0.0
        %834 = vmatpush1.msra.mxu0 0.0
        %835 = vmatprep.subr.mxu0 0.0
        %836 = vmatpush1.msra.mxu0 0.0
        %837 = vmatprep.subr.mxu0 0.0
        %838 = vmatpush1.msra.mxu0 0.0
        %839 = vmatprep.subr.mxu0 0.0
        %840 = vmatpush1.msra.mxu0 0.0
        %841 = vmatprep.subr.mxu0 0.0
        %842 = vmatpush1.msra.mxu0 0.0
        %843 = vmatprep.subr.mxu0 0.0
        %844 = vmatpush1.msra.mxu0 0.0
        %845 = vmatprep.subr.mxu0 0.0
        %846 = vmatpush1.msra.mxu0 0.0
        %847 = vmatprep.subr.mxu0 0.0
        %848 = vmatpush1.msra.mxu0 0.0
        %849 = vmatprep.subr.mxu0 0.0
        %850 = vmatpush1.msra.mxu0 0.0
        %851 = vmatprep.subr.mxu0 0.0
        %852 = vmatpush1.msra.mxu0 0.0
        %853 = vmatprep.subr.mxu0 0.0
        %854 = vmatpush1.msra.mxu0 0.0
        %855 = vmatprep.subr.mxu0 0.0
        %856 = vmatpush1.msra.mxu0 0.0
        %857 = vmatprep.subr.mxu0 0.0
        %858 = vmatpush1.msra.mxu0 0.0
        %859 = vmatprep.subr.mxu0 0.0
        %860 = vmatpush1.msra.mxu0 0.0
        %861 = vmatprep.subr.mxu0 0.0
        %862 = vmatpush1.msra.mxu0 0.0
        %863 = vmatprep.subr.mxu0 0.0
        %864 = vmatpush1.msra.mxu0 0.0
        %865 = vmatprep.subr.mxu0 0.0
        %866 = vmatpush1.msra.mxu0 0.0
        %867 = vmatprep.subr.mxu0 0.0
        %868 = vmatpush1.msra.mxu0 0.0
        %869 = vmatprep.subr.mxu0 0.0
        %870 = vmatpush1.msra.mxu0 0.0
        %871 = vmatprep.subr.mxu0 0.0
        %872 = vmatpush1.msra.mxu0 0.0
        %873 = vmatprep.subr.mxu0 0.0
        %874 = vmatpush1.msra.mxu0 0.0
        %875 = vmatprep.subr.mxu0 0.0
        %876 = vmatpush1.msra.mxu0 0.0
        %877 = vmatprep.mubr.f32.mxu0 0.0
        %878 = vmatmul.mubr.f32.gmra.mrb[0].mxu0 %v811
        %v879 = vpop.f32.mrb[0].mxu0
        %v880 = vadd.f32 0.0, %v879
        %v881 = vpop.f32.mrb[0].mxu0
        %v882 = vadd.f32 0.0, %v881
        %883 = vdwg.mxu0
        %884 = vst.msk [vmem:[#allocation2] sm:$0xff] %vm263, %v882
        %v886 = vcombine.high %v334, %v334
        %v888 = vunpack.c.l.s4 1966171168
        %v889 = vunpack.c.0.s8 %v888
        %v890 = vlaneseq
        %v891 = vshrl.u32 %v890, 7
        %v892 = vsub.s32 %v889, %v891
        %v893 = vrot.slane %v334, %v892
        %v895 = vunpack.c.l.s4 1966171168
        %v896 = vunpack.c.0.s8 %v895
        %v897 = vlaneseq
        %v898 = vshrl.u32 %v897, 7
        %v899 = vsub.s32 %v896, %v898
        %v900 = vrot.slane %v886, %v899
        %v901 = vcombine.high %v893, %v893
        %v902 = vcombine.high %v900, %v900
        %v904 = vunpack.c.l.s4 1966171168
        %v905 = vunpack.c.0.s8 %v904
        %v906 = vlaneseq
        %v907 = vshrl.u32 %v906, 7
        %v908 = vsub.s32 %v905, %v907
        %v909 = vrot.slane %v893, %v908
        %v911 = vunpack.c.l.s4 1966171168
        %v912 = vunpack.c.0.s8 %v911
        %v913 = vlaneseq
        %v914 = vshrl.u32 %v913, 7
        %v915 = vsub.s32 %v912, %v914
        %v916 = vrot.slane %v900, %v915
        %v918 = vunpack.c.l.s4 1966171168
        %v919 = vunpack.c.0.s8 %v918
        %v920 = vlaneseq
        %v921 = vshrl.u32 %v920, 7
        %v922 = vsub.s32 %v919, %v921
        %v923 = vrot.slane %v901, %v922
        %v925 = vunpack.c.l.s4 1966171168
        %v926 = vunpack.c.0.s8 %v925
        %v927 = vlaneseq
        %v928 = vshrl.u32 %v927, 7
        %v929 = vsub.s32 %v926, %v928
        %v930 = vrot.slane %v902, %v929
        %v931 = vcombine.high %v909, %v909
        %v932 = vcombine.high %v916, %v916
        %v933 = vcombine.high %v923, %v923
        %v934 = vcombine.high %v930, %v930
        %v944 = vcombine.high %v412, %v412
        %v946 = vunpack.c.l.s4 1966171168
        %v947 = vunpack.c.0.s8 %v946
        %v948 = vlaneseq
        %v949 = vshrl.u32 %v948, 7
        %v950 = vsub.s32 %v947, %v949
        %v951 = vrot.slane %v412, %v950
        %v953 = vunpack.c.l.s4 1966171168
        %v954 = vunpack.c.0.s8 %v953
        %v955 = vlaneseq
        %v956 = vshrl.u32 %v955, 7
        %v957 = vsub.s32 %v954, %v956
        %v958 = vrot.slane %v944, %v957
        %v959 = vcombine.high %v951, %v951
        %v960 = vcombine.high %v958, %v958
        %v962 = vunpack.c.l.s4 1966171168
        %v963 = vunpack.c.0.s8 %v962
        %v964 = vlaneseq
        %v965 = vshrl.u32 %v964, 7
        %v966 = vsub.s32 %v963, %v965
        %v967 = vrot.slane %v951, %v966
        %v969 = vunpack.c.l.s4 1966171168
        %v970 = vunpack.c.0.s8 %v969
        %v971 = vlaneseq
        %v972 = vshrl.u32 %v971, 7
        %v973 = vsub.s32 %v970, %v972
        %v974 = vrot.slane %v958, %v973
        %v976 = vunpack.c.l.s4 1966171168
        %v977 = vunpack.c.0.s8 %v976
        %v978 = vlaneseq
        %v979 = vshrl.u32 %v978, 7
        %v980 = vsub.s32 %v977, %v979
        %v981 = vrot.slane %v959, %v980
        %v983 = vunpack.c.l.s4 1966171168
        %v984 = vunpack.c.0.s8 %v983
        %v985 = vlaneseq
        %v986 = vshrl.u32 %v985, 7
        %v987 = vsub.s32 %v984, %v986
        %v988 = vrot.slane %v960, %v987
        %v989 = vcombine.high %v967, %v967
        %v990 = vcombine.high %v974, %v974
        %v991 = vcombine.high %v981, %v981
        %v992 = vcombine.high %v988, %v988
        %v994 = vcombine.high %v490, %v490
        %v996 = vunpack.c.l.s4 1966171168
        %v997 = vunpack.c.0.s8 %v996
        %v998 = vlaneseq
        %v999 = vshrl.u32 %v998, 7
        %v1000 = vsub.s32 %v997, %v999
        %v1001 = vrot.slane %v490, %v1000
        %v1003 = vunpack.c.l.s4 1966171168
        %v1004 = vunpack.c.0.s8 %v1003
        %v1005 = vlaneseq
        %v1006 = vshrl.u32 %v1005, 7
        %v1007 = vsub.s32 %v1004, %v1006
        %v1008 = vrot.slane %v994, %v1007
        %v1009 = vcombine.high %v1001, %v1001
        %v1010 = vcombine.high %v1008, %v1008
        %v1012 = vunpack.c.l.s4 1966171168
        %v1013 = vunpack.c.0.s8 %v1012
        %v1014 = vlaneseq
        %v1015 = vshrl.u32 %v1014, 7
        %v1016 = vsub.s32 %v1013, %v1015
        %v1017 = vrot.slane %v1001, %v1016
        %v1019 = vunpack.c.l.s4 1966171168
        %v1020 = vunpack.c.0.s8 %v1019
        %v1021 = vlaneseq
        %v1022 = vshrl.u32 %v1021, 7
        %v1023 = vsub.s32 %v1020, %v1022
        %v1024 = vrot.slane %v1008, %v1023
        %v1026 = vunpack.c.l.s4 1966171168
        %v1027 = vunpack.c.0.s8 %v1026
        %v1028 = vlaneseq
        %v1029 = vshrl.u32 %v1028, 7
        %v1030 = vsub.s32 %v1027, %v1029
        %v1031 = vrot.slane %v1009, %v1030
        %v1033 = vunpack.c.l.s4 1966171168
        %v1034 = vunpack.c.0.s8 %v1033
        %v1035 = vlaneseq
        %v1036 = vshrl.u32 %v1035, 7
        %v1037 = vsub.s32 %v1034, %v1036
        %v1038 = vrot.slane %v1010, %v1037
        %v1039 = vcombine.high %v1017, %v1017
        %v1040 = vcombine.high %v1024, %v1024
        %v1041 = vcombine.high %v1031, %v1031
        %v1042 = vcombine.high %v1038, %v1038
        %v1044 = vcombine.high %v568, %v568
        %v1046 = vunpack.c.l.s4 1966171168
        %v1047 = vunpack.c.0.s8 %v1046
        %v1048 = vlaneseq
        %v1049 = vshrl.u32 %v1048, 7
        %v1050 = vsub.s32 %v1047, %v1049
        %v1051 = vrot.slane %v568, %v1050
        %v1053 = vunpack.c.l.s4 1966171168
        %v1054 = vunpack.c.0.s8 %v1053
        %v1055 = vlaneseq
        %v1056 = vshrl.u32 %v1055, 7
        %v1057 = vsub.s32 %v1054, %v1056
        %v1058 = vrot.slane %v1044, %v1057
        %v1059 = vcombine.high %v1051, %v1051
        %v1060 = vcombine.high %v1058, %v1058
        %v1062 = vunpack.c.l.s4 1966171168
        %v1063 = vunpack.c.0.s8 %v1062
        %v1064 = vlaneseq
        %v1065 = vshrl.u32 %v1064, 7
        %v1066 = vsub.s32 %v1063, %v1065
        %v1067 = vrot.slane %v1051, %v1066
        %v1069 = vunpack.c.l.s4 1966171168
        %v1070 = vunpack.c.0.s8 %v1069
        %v1071 = vlaneseq
        %v1072 = vshrl.u32 %v1071, 7
        %v1073 = vsub.s32 %v1070, %v1072
        %v1074 = vrot.slane %v1058, %v1073
        %v1076 = vunpack.c.l.s4 1966171168
        %v1077 = vunpack.c.0.s8 %v1076
        %v1078 = vlaneseq
        %v1079 = vshrl.u32 %v1078, 7
        %v1080 = vsub.s32 %v1077, %v1079
        %v1081 = vrot.slane %v1059, %v1080
        %v1083 = vunpack.c.l.s4 1966171168
        %v1084 = vunpack.c.0.s8 %v1083
        %v1085 = vlaneseq
        %v1086 = vshrl.u32 %v1085, 7
        %v1087 = vsub.s32 %v1084, %v1086
        %v1088 = vrot.slane %v1060, %v1087
        %v1089 = vcombine.high %v1067, %v1067
        %v1090 = vcombine.high %v1074, %v1074
        %v1091 = vcombine.high %v1081, %v1081
        %v1092 = vcombine.high %v1088, %v1088
        %v1094 = vcombine.high %v646, %v646
        %v1096 = vunpack.c.l.s4 1966171168
        %v1097 = vunpack.c.0.s8 %v1096
        %v1098 = vlaneseq
        %v1099 = vshrl.u32 %v1098, 7
        %v1100 = vsub.s32 %v1097, %v1099
        %v1101 = vrot.slane %v646, %v1100
        %v1103 = vunpack.c.l.s4 1966171168
        %v1104 = vunpack.c.0.s8 %v1103
        %v1105 = vlaneseq
        %v1106 = vshrl.u32 %v1105, 7
        %v1107 = vsub.s32 %v1104, %v1106
        %v1108 = vrot.slane %v1094, %v1107
        %v1109 = vcombine.high %v1101, %v1101
        %v1110 = vcombine.high %v1108, %v1108
        %v1112 = vunpack.c.l.s4 1966171168
        %v1113 = vunpack.c.0.s8 %v1112
        %v1114 = vlaneseq
        %v1115 = vshrl.u32 %v1114, 7
        %v1116 = vsub.s32 %v1113, %v1115
        %v1117 = vrot.slane %v1101, %v1116
        %v1119 = vunpack.c.l.s4 1966171168
        %v1120 = vunpack.c.0.s8 %v1119
        %v1121 = vlaneseq
        %v1122 = vshrl.u32 %v1121, 7
        %v1123 = vsub.s32 %v1120, %v1122
        %v1124 = vrot.slane %v1108, %v1123
        %v1126 = vunpack.c.l.s4 1966171168
        %v1127 = vunpack.c.0.s8 %v1126
        %v1128 = vlaneseq
        %v1129 = vshrl.u32 %v1128, 7
        %v1130 = vsub.s32 %v1127, %v1129
        %v1131 = vrot.slane %v1109, %v1130
        %v1133 = vunpack.c.l.s4 1966171168
        %v1134 = vunpack.c.0.s8 %v1133
        %v1135 = vlaneseq
        %v1136 = vshrl.u32 %v1135, 7
        %v1137 = vsub.s32 %v1134, %v1136
        %v1138 = vrot.slane %v1110, %v1137
        %v1139 = vcombine.high %v1117, %v1117
        %v1140 = vcombine.high %v1124, %v1124
        %v1141 = vcombine.high %v1131, %v1131
        %v1142 = vcombine.high %v1138, %v1138
        %v1144 = vcombine.high %v724, %v724
        %v1146 = vunpack.c.l.s4 1966171168
        %v1147 = vunpack.c.0.s8 %v1146
        %v1148 = vlaneseq
        %v1149 = vshrl.u32 %v1148, 7
        %v1150 = vsub.s32 %v1147, %v1149
        %v1151 = vrot.slane %v724, %v1150
        %v1153 = vunpack.c.l.s4 1966171168
        %v1154 = vunpack.c.0.s8 %v1153
        %v1155 = vlaneseq
        %v1156 = vshrl.u32 %v1155, 7
        %v1157 = vsub.s32 %v1154, %v1156
        %v1158 = vrot.slane %v1144, %v1157
        %v1159 = vcombine.high %v1151, %v1151
        %v1160 = vcombine.high %v1158, %v1158
        %v1162 = vunpack.c.l.s4 1966171168
        %v1163 = vunpack.c.0.s8 %v1162
        %v1164 = vlaneseq
        %v1165 = vshrl.u32 %v1164, 7
        %v1166 = vsub.s32 %v1163, %v1165
        %v1167 = vrot.slane %v1151, %v1166
        %v1169 = vunpack.c.l.s4 1966171168
        %v1170 = vunpack.c.0.s8 %v1169
        %v1171 = vlaneseq
        %v1172 = vshrl.u32 %v1171, 7
        %v1173 = vsub.s32 %v1170, %v1172
        %v1174 = vrot.slane %v1158, %v1173
        %v1176 = vunpack.c.l.s4 1966171168
        %v1177 = vunpack.c.0.s8 %v1176
        %v1178 = vlaneseq
        %v1179 = vshrl.u32 %v1178, 7
        %v1180 = vsub.s32 %v1177, %v1179
        %v1181 = vrot.slane %v1159, %v1180
        %v1183 = vunpack.c.l.s4 1966171168
        %v1184 = vunpack.c.0.s8 %v1183
        %v1185 = vlaneseq
        %v1186 = vshrl.u32 %v1185, 7
        %v1187 = vsub.s32 %v1184, %v1186
        %v1188 = vrot.slane %v1160, %v1187
        %v1189 = vcombine.high %v1167, %v1167
        %v1190 = vcombine.high %v1174, %v1174
        %v1191 = vcombine.high %v1181, %v1181
        %v1192 = vcombine.high %v1188, %v1188
        %v1194 = vcombine.high %v802, %v802
        %v1196 = vunpack.c.l.s4 1966171168
        %v1197 = vunpack.c.0.s8 %v1196
        %v1198 = vlaneseq
        %v1199 = vshrl.u32 %v1198, 7
        %v1200 = vsub.s32 %v1197, %v1199
        %v1201 = vrot.slane %v802, %v1200
        %v1203 = vunpack.c.l.s4 1966171168
        %v1204 = vunpack.c.0.s8 %v1203
        %v1205 = vlaneseq
        %v1206 = vshrl.u32 %v1205, 7
        %v1207 = vsub.s32 %v1204, %v1206
        %v1208 = vrot.slane %v1194, %v1207
        %v1209 = vcombine.high %v1201, %v1201
        %v1210 = vcombine.high %v1208, %v1208
        %v1212 = vunpack.c.l.s4 1966171168
        %v1213 = vunpack.c.0.s8 %v1212
        %v1214 = vlaneseq
        %v1215 = vshrl.u32 %v1214, 7
        %v1216 = vsub.s32 %v1213, %v1215
        %v1217 = vrot.slane %v1201, %v1216
        %v1219 = vunpack.c.l.s4 1966171168
        %v1220 = vunpack.c.0.s8 %v1219
        %v1221 = vlaneseq
        %v1222 = vshrl.u32 %v1221, 7
        %v1223 = vsub.s32 %v1220, %v1222
        %v1224 = vrot.slane %v1208, %v1223
        %v1226 = vunpack.c.l.s4 1966171168
        %v1227 = vunpack.c.0.s8 %v1226
        %v1228 = vlaneseq
        %v1229 = vshrl.u32 %v1228, 7
        %v1230 = vsub.s32 %v1227, %v1229
        %v1231 = vrot.slane %v1209, %v1230
        %v1233 = vunpack.c.l.s4 1966171168
        %v1234 = vunpack.c.0.s8 %v1233
        %v1235 = vlaneseq
        %v1236 = vshrl.u32 %v1235, 7
        %v1237 = vsub.s32 %v1234, %v1236
        %v1238 = vrot.slane %v1210, %v1237
        %v1239 = vcombine.high %v1217, %v1217
        %v1240 = vcombine.high %v1224, %v1224
        %v1241 = vcombine.high %v1231, %v1231
        %v1242 = vcombine.high %v1238, %v1238
        %v1244 = vcombine.high %v880, %v880
        %v1246 = vunpack.c.l.s4 1966171168
        %v1247 = vunpack.c.0.s8 %v1246
        %v1248 = vlaneseq
        %v1249 = vshrl.u32 %v1248, 7
        %v1250 = vsub.s32 %v1247, %v1249
        %v1251 = vrot.slane %v880, %v1250
        %v1253 = vunpack.c.l.s4 1966171168
        %v1254 = vunpack.c.0.s8 %v1253
        %v1255 = vlaneseq
        %v1256 = vshrl.u32 %v1255, 7
        %v1257 = vsub.s32 %v1254, %v1256
        %v1258 = vrot.slane %v1244, %v1257
        %v1259 = vcombine.high %v1251, %v1251
        %v1260 = vcombine.high %v1258, %v1258
        %v1262 = vunpack.c.l.s4 1966171168
        %v1263 = vunpack.c.0.s8 %v1262
        %v1264 = vlaneseq
        %v1265 = vshrl.u32 %v1264, 7
        %v1266 = vsub.s32 %v1263, %v1265
        %v1267 = vrot.slane %v1251, %v1266
        %v1269 = vunpack.c.l.s4 1966171168
        %v1270 = vunpack.c.0.s8 %v1269
        %v1271 = vlaneseq
        %v1272 = vshrl.u32 %v1271, 7
        %v1273 = vsub.s32 %v1270, %v1272
        %v1274 = vrot.slane %v1258, %v1273
        %v1276 = vunpack.c.l.s4 1966171168
        %v1277 = vunpack.c.0.s8 %v1276
        %v1278 = vlaneseq
        %v1279 = vshrl.u32 %v1278, 7
        %v1280 = vsub.s32 %v1277, %v1279
        %v1281 = vrot.slane %v1259, %v1280
        %v1283 = vunpack.c.l.s4 1966171168
        %v1284 = vunpack.c.0.s8 %v1283
        %v1285 = vlaneseq
        %v1286 = vshrl.u32 %v1285, 7
        %v1287 = vsub.s32 %v1284, %v1286
        %v1288 = vrot.slane %v1260, %v1287
        %v1289 = vcombine.high %v1267, %v1267
        %v1290 = vcombine.high %v1274, %v1274
        %v1291 = vcombine.high %v1281, %v1281
        %v1292 = vcombine.high %v1288, %v1288
        %v1293 = vlaneseq
        %v1294 = vshrl.u32 %v1293, 7
        %v1295 = vsub.s32 0, %v1294
        %v1296 = vrot.slane %v967, %v1295
        %v1297 = vlaneseq
        %v1298 = vshrl.u32 %v1297, 7
        %v1299 = vsub.s32 0, %v1298
        %v1300 = vrot.slane %v981, %v1299
        %v1301 = vlaneseq
        %v1302 = vshrl.u32 %v1301, 7
        %v1303 = vsub.s32 0, %v1302
        %v1304 = vrot.slane %v989, %v1303
        %v1305 = vlaneseq
        %v1306 = vshrl.u32 %v1305, 7
        %v1307 = vsub.s32 0, %v1306
        %v1308 = vrot.slane %v991, %v1307
        %v1309 = vlaneseq
        %v1310 = vshrl.u32 %v1309, 7
        %v1311 = vsub.s32 0, %v1310
        %v1312 = vrot.slane %v974, %v1311
        %v1313 = vlaneseq
        %v1314 = vshrl.u32 %v1313, 7
        %v1315 = vsub.s32 0, %v1314
        %v1316 = vrot.slane %v988, %v1315
        %v1317 = vlaneseq
        %v1318 = vshrl.u32 %v1317, 7
        %v1319 = vsub.s32 0, %v1318
        %v1320 = vrot.slane %v990, %v1319
        %v1321 = vlaneseq
        %v1322 = vshrl.u32 %v1321, 7
        %v1323 = vsub.s32 0, %v1322
        %v1324 = vrot.slane %v992, %v1323
        %v1333 = vlaneseq
        %v1334 = vshrl.u32 %v1333, 7
        %v1335 = vsub.s32 0, %v1334
        %v1336 = vrot.slane %v1017, %v1335
        %v1337 = vlaneseq
        %v1338 = vshrl.u32 %v1337, 7
        %v1339 = vsub.s32 0, %v1338
        %v1340 = vrot.slane %v1031, %v1339
        %v1341 = vlaneseq
        %v1342 = vshrl.u32 %v1341, 7
        %v1343 = vsub.s32 0, %v1342
        %v1344 = vrot.slane %v1039, %v1343
        %v1345 = vlaneseq
        %v1346 = vshrl.u32 %v1345, 7
        %v1347 = vsub.s32 0, %v1346
        %v1348 = vrot.slane %v1041, %v1347
        %v1349 = vlaneseq
        %v1350 = vshrl.u32 %v1349, 7
        %v1351 = vsub.s32 0, %v1350
        %v1352 = vrot.slane %v1024, %v1351
        %v1353 = vlaneseq
        %v1354 = vshrl.u32 %v1353, 7
        %v1355 = vsub.s32 0, %v1354
        %v1356 = vrot.slane %v1038, %v1355
        %v1357 = vlaneseq
        %v1358 = vshrl.u32 %v1357, 7
        %v1359 = vsub.s32 0, %v1358
        %v1360 = vrot.slane %v1040, %v1359
        %v1361 = vlaneseq
        %v1362 = vshrl.u32 %v1361, 7
        %v1363 = vsub.s32 0, %v1362
        %v1364 = vrot.slane %v1042, %v1363
        %v1373 = vlaneseq
        %v1374 = vshrl.u32 %v1373, 7
        %v1375 = vsub.s32 0, %v1374
        %v1376 = vrot.slane %v1067, %v1375
        %v1377 = vlaneseq
        %v1378 = vshrl.u32 %v1377, 7
        %v1379 = vsub.s32 0, %v1378
        %v1380 = vrot.slane %v1081, %v1379
        %v1381 = vlaneseq
        %v1382 = vshrl.u32 %v1381, 7
        %v1383 = vsub.s32 0, %v1382
        %v1384 = vrot.slane %v1089, %v1383
        %v1385 = vlaneseq
        %v1386 = vshrl.u32 %v1385, 7
        %v1387 = vsub.s32 0, %v1386
        %v1388 = vrot.slane %v1091, %v1387
        %v1389 = vlaneseq
        %v1390 = vshrl.u32 %v1389, 7
        %v1391 = vsub.s32 0, %v1390
        %v1392 = vrot.slane %v1074, %v1391
        %v1393 = vlaneseq
        %v1394 = vshrl.u32 %v1393, 7
        %v1395 = vsub.s32 0, %v1394
        %v1396 = vrot.slane %v1088, %v1395
        %v1397 = vlaneseq
        %v1398 = vshrl.u32 %v1397, 7
        %v1399 = vsub.s32 0, %v1398
        %v1400 = vrot.slane %v1090, %v1399
        %v1401 = vlaneseq
        %v1402 = vshrl.u32 %v1401, 7
        %v1403 = vsub.s32 0, %v1402
        %v1404 = vrot.slane %v1092, %v1403
        %v1413 = vlaneseq
        %v1414 = vshrl.u32 %v1413, 7
        %v1415 = vsub.s32 0, %v1414
        %v1416 = vrot.slane %v1117, %v1415
        %v1417 = vlaneseq
        %v1418 = vshrl.u32 %v1417, 7
        %v1419 = vsub.s32 0, %v1418
        %v1420 = vrot.slane %v1131, %v1419
        %v1421 = vlaneseq
        %v1422 = vshrl.u32 %v1421, 7
        %v1423 = vsub.s32 0, %v1422
        %v1424 = vrot.slane %v1139, %v1423
        %v1425 = vlaneseq
        %v1426 = vshrl.u32 %v1425, 7
        %v1427 = vsub.s32 0, %v1426
        %v1428 = vrot.slane %v1141, %v1427
        %v1429 = vlaneseq
        %v1430 = vshrl.u32 %v1429, 7
        %v1431 = vsub.s32 0, %v1430
        %v1432 = vrot.slane %v1124, %v1431
        %v1433 = vlaneseq
        %v1434 = vshrl.u32 %v1433, 7
        %v1435 = vsub.s32 0, %v1434
        %v1436 = vrot.slane %v1138, %v1435
        %v1437 = vlaneseq
        %v1438 = vshrl.u32 %v1437, 7
        %v1439 = vsub.s32 0, %v1438
        %v1440 = vrot.slane %v1140, %v1439
        %v1441 = vlaneseq
        %v1442 = vshrl.u32 %v1441, 7
        %v1443 = vsub.s32 0, %v1442
        %v1444 = vrot.slane %v1142, %v1443
        %v1453 = vlaneseq
        %v1454 = vshrl.u32 %v1453, 7
        %v1455 = vsub.s32 0, %v1454
        %v1456 = vrot.slane %v1167, %v1455
        %v1457 = vlaneseq
        %v1458 = vshrl.u32 %v1457, 7
        %v1459 = vsub.s32 0, %v1458
        %v1460 = vrot.slane %v1181, %v1459
        %v1461 = vlaneseq
        %v1462 = vshrl.u32 %v1461, 7
        %v1463 = vsub.s32 0, %v1462
        %v1464 = vrot.slane %v1189, %v1463
        %v1465 = vlaneseq
        %v1466 = vshrl.u32 %v1465, 7
        %v1467 = vsub.s32 0, %v1466
        %v1468 = vrot.slane %v1191, %v1467
        %v1469 = vlaneseq
        %v1470 = vshrl.u32 %v1469, 7
        %v1471 = vsub.s32 0, %v1470
        %v1472 = vrot.slane %v1174, %v1471
        %v1473 = vlaneseq
        %v1474 = vshrl.u32 %v1473, 7
        %v1475 = vsub.s32 0, %v1474
        %v1476 = vrot.slane %v1188, %v1475
        %v1477 = vlaneseq
        %v1478 = vshrl.u32 %v1477, 7
        %v1479 = vsub.s32 0, %v1478
        %v1480 = vrot.slane %v1190, %v1479
        %v1481 = vlaneseq
        %v1482 = vshrl.u32 %v1481, 7
        %v1483 = vsub.s32 0, %v1482
        %v1484 = vrot.slane %v1192, %v1483
        %v1493 = vlaneseq
        %v1494 = vshrl.u32 %v1493, 7
        %v1495 = vsub.s32 0, %v1494
        %v1496 = vrot.slane %v1217, %v1495
        %v1497 = vlaneseq
        %v1498 = vshrl.u32 %v1497, 7
        %v1499 = vsub.s32 0, %v1498
        %v1500 = vrot.slane %v1231, %v1499
        %v1501 = vlaneseq
        %v1502 = vshrl.u32 %v1501, 7
        %v1503 = vsub.s32 0, %v1502
        %v1504 = vrot.slane %v1239, %v1503
        %v1505 = vlaneseq
        %v1506 = vshrl.u32 %v1505, 7
        %v1507 = vsub.s32 0, %v1506
        %v1508 = vrot.slane %v1241, %v1507
        %v1509 = vlaneseq
        %v1510 = vshrl.u32 %v1509, 7
        %v1511 = vsub.s32 0, %v1510
        %v1512 = vrot.slane %v1224, %v1511
        %v1513 = vlaneseq
        %v1514 = vshrl.u32 %v1513, 7
        %v1515 = vsub.s32 0, %v1514
        %v1516 = vrot.slane %v1238, %v1515
        %v1517 = vlaneseq
        %v1518 = vshrl.u32 %v1517, 7
        %v1519 = vsub.s32 0, %v1518
        %v1520 = vrot.slane %v1240, %v1519
        %v1521 = vlaneseq
        %v1522 = vshrl.u32 %v1521, 7
        %v1523 = vsub.s32 0, %v1522
        %v1524 = vrot.slane %v1242, %v1523
        %v1533 = vlaneseq
        %v1534 = vshrl.u32 %v1533, 7
        %v1535 = vsub.s32 0, %v1534
        %v1536 = vrot.slane %v1267, %v1535
        %v1537 = vlaneseq
        %v1538 = vshrl.u32 %v1537, 7
        %v1539 = vsub.s32 0, %v1538
        %v1540 = vrot.slane %v1281, %v1539
        %v1541 = vlaneseq
        %v1542 = vshrl.u32 %v1541, 7
        %v1543 = vsub.s32 0, %v1542
        %v1544 = vrot.slane %v1289, %v1543
        %v1545 = vlaneseq
        %v1546 = vshrl.u32 %v1545, 7
        %v1547 = vsub.s32 0, %v1546
        %v1548 = vrot.slane %v1291, %v1547
        %v1549 = vlaneseq
        %v1550 = vshrl.u32 %v1549, 7
        %v1551 = vsub.s32 0, %v1550
        %v1552 = vrot.slane %v1274, %v1551
        %v1553 = vlaneseq
        %v1554 = vshrl.u32 %v1553, 7
        %v1555 = vsub.s32 0, %v1554
        %v1556 = vrot.slane %v1288, %v1555
        %v1557 = vlaneseq
        %v1558 = vshrl.u32 %v1557, 7
        %v1559 = vsub.s32 0, %v1558
        %v1560 = vrot.slane %v1290, %v1559
        %v1561 = vlaneseq
        %v1562 = vshrl.u32 %v1561, 7
        %v1563 = vsub.s32 0, %v1562
        %v1564 = vrot.slane %v1292, %v1563
        %vm1573 = vcmask 1040384
        %v1574 = vsel %vm1573, %v909, %v1296
        %v1575 = vsel %vm1573, %v923, %v1300
        %v1576 = vsel %vm1573, %v931, %v1304
        %v1577 = vsel %vm1573, %v933, %v1308
        %v1578 = vsel %vm1573, %v916, %v1312
        %v1579 = vsel %vm1573, %v930, %v1316
        %v1580 = vsel %vm1573, %v932, %v1320
        %v1581 = vsel %vm1573, %v934, %v1324
        %vm1582 = vcmask 1041408
        %v1583 = vsel %vm1582, %v1574, %v1336
        %v1584 = vsel %vm1582, %v1575, %v1340
        %v1585 = vsel %vm1582, %v1576, %v1344
        %v1586 = vsel %vm1582, %v1577, %v1348
        %v1587 = vsel %vm1582, %v1578, %v1352
        %v1588 = vsel %vm1582, %v1579, %v1356
        %v1589 = vsel %vm1582, %v1580, %v1360
        %v1590 = vsel %vm1582, %v1581, %v1364
        %vm1591 = vcmask 1042432
        %v1592 = vsel %vm1591, %v1583, %v1376
        %v1593 = vsel %vm1591, %v1584, %v1380
        %v1594 = vsel %vm1591, %v1585, %v1384
        %v1595 = vsel %vm1591, %v1586, %v1388
        %v1596 = vsel %vm1591, %v1587, %v1392
        %v1597 = vsel %vm1591, %v1588, %v1396
        %v1598 = vsel %vm1591, %v1589, %v1400
        %v1599 = vsel %vm1591, %v1590, %v1404
        %vm1600 = vcmask 1043456
        %v1601 = vsel %vm1600, %v1592, %v1416
        %v1602 = vsel %vm1600, %v1593, %v1420
        %v1603 = vsel %vm1600, %v1594, %v1424
        %v1604 = vsel %vm1600, %v1595, %v1428
        %v1605 = vsel %vm1600, %v1596, %v1432
        %v1606 = vsel %vm1600, %v1597, %v1436
        %v1607 = vsel %vm1600, %v1598, %v1440
        %v1608 = vsel %vm1600, %v1599, %v1444
        %vm1609 = vcmask 1044480
        %v1610 = vsel %vm1609, %v1601, %v1456
        %v1611 = vsel %vm1609, %v1602, %v1460
        %v1612 = vsel %vm1609, %v1603, %v1464
        %v1613 = vsel %vm1609, %v1604, %v1468
        %v1614 = vsel %vm1609, %v1605, %v1472
        %v1615 = vsel %vm1609, %v1606, %v1476
        %v1616 = vsel %vm1609, %v1607, %v1480
        %v1617 = vsel %vm1609, %v1608, %v1484
        %vm1618 = vcmask 1045504
        %v1619 = vsel %vm1618, %v1610, %v1496
        %v1620 = vsel %vm1618, %v1611, %v1500
        %v1621 = vsel %vm1618, %v1612, %v1504
        %v1622 = vsel %vm1618, %v1613, %v1508
        %v1623 = vsel %vm1618, %v1614, %v1512
        %v1624 = vsel %vm1618, %v1615, %v1516
        %v1625 = vsel %vm1618, %v1616, %v1520
        %v1626 = vsel %vm1618, %v1617, %v1524
        %vm1627 = vcmask 1046528
        %v1628 = vsel %vm1627, %v1619, %v1536
        %v1629 = vsel %vm1627, %v1620, %v1540
        %v1630 = vsel %vm1627, %v1621, %v1544
        %v1631 = vsel %vm1627, %v1622, %v1548
        %v1632 = vsel %vm1627, %v1623, %v1552
        %v1633 = vsel %vm1627, %v1624, %v1556
        %v1634 = vsel %vm1627, %v1625, %v1560
        %v1635 = vsel %vm1627, %v1626, %v1564
        %v1636 = vld [vmem:[%s3] sm:$0x1]
        %v1638 = vlaneseq
        %v1639 = vshrl.u32 %v1638, 7
        %v1640 = vsub.s32 0, %v1639
        %v1641 = vrot.slane %v1636, %v1640
        %v1643 = vadd.f32 %v1628, %v1641
        %v1644 = vadd.f32 %v1629, %v1641
        %v1645 = vadd.f32 %v1630, %v1641
        %v1646 = vadd.f32 %v1631, %v1641
        %v1647 = vadd.f32 %v1632, %v1641
        %v1648 = vadd.f32 %v1633, %v1641
        %v1649 = vadd.f32 %v1634, %v1641
        %v1650 = vadd.f32 %v1635, %v1641
        %1651 = vst [vmem:[%s242] sm:$0xff] %v1643
        %1652 = vst [vmem:[%s242 + $0x8] sm:$0xff] %v1644
        %1653 = vst [vmem:[%s242 + $0x10] sm:$0xff] %v1645
        %1654 = vst [vmem:[%s242 + $0x18] sm:$0xff] %v1646
        %1655 = vst [vmem:[%s242 + $0x20] sm:$0xff] %v1647
        %1656 = vst [vmem:[%s242 + $0x28] sm:$0xff] %v1648
        %1657 = vst [vmem:[%s242 + $0x30] sm:$0xff] %v1649
        %1658 = vst [vmem:[%s242 + $0x38] sm:$0xff] %v1650
        %s1659 = sand.u32 %s119, 1
        %s1660 = scalar_lea.sflag [#allocation5], %s1659
        %s1661 = sand.u32 %s119, 1
        %s1662 = smul.addr %s1661, 64
        %s1663 = scalar_lea.vmem [#allocation9], %s1662
        // Predicated region
        $region53: #{tpu_custom_call.1} parent=35 // pred_check
          %p1664 = pneg %p129
        $region54: #{tpu_custom_call.1} parent=35 // pred_check_branch
          %1666 = sbr.rel (%p1664) target = $region56
        $region55: #{tpu_custom_call.1} parent=35 // pred_region
          %s1668 = ssub.s32 1024, 1024
          %1669 = vsyncadd %s1660, %s1668
          %s1670 = smul.addr %s22, 128
          %s1671 = scalar_lea.hbm %s4, %s1670
          %s1672 = sshll.u32 %s1663, 4
          %s1673 = int_to_ptr.vmem [resolvable:$true] %s1672
          %1678 = dma.vmem_to_hbm [thread:$0]  %s1673, 1024, %s1671, %s1660, 128, 256, 8
        $region56: #{tpu_custom_call.1} parent=35 // pred_fallthru
          _
      $region36: #{tpu_custom_call.1} parent=5 // pred_fallthru
        _
      %p1679 = scmp.le.s32.totalorder 2, %s17
      // Predicated region
      $region57: #{tpu_custom_call.1} parent=5 // pred_check
        %p1680 = pneg %p1679
      $region58: #{tpu_custom_call.1} parent=5 // pred_check_branch
        %1682 = sbr.rel (%p1680) target = $region60
      $region59: #{tpu_custom_call.1} parent=5 // pred_region
        %s1683 = ssub.s32 %s17, 2
        // Predicated region
        $region61: #{tpu_custom_call.1} parent=59 // pred_check
          %p1684 = pneg %p135
        $region62: #{tpu_custom_call.1} parent=59 // pred_check_branch
          %1686 = sbr.rel (%p1684) target = $region64
        $region63: #{tpu_custom_call.1} parent=59 // pred_region
          %s1687 = sand.u32 %s120, 1
          %s1688 = scalar_lea.sflag [#allocation5], %s1687
          %s1689 = sand.u32 %s120, 1
          %s1690 = smul.addr %s1689, 64
          %s1691 = scalar_lea.vmem [#allocation9], %s1690
          %1692 = dma.done %s1688, 1024
        $region64: #{tpu_custom_call.1} parent=59 // pred_fallthru
          _
      $region60: #{tpu_custom_call.1} parent=5 // pred_fallthru
        _
    $region6: #{tpu_custom_call.1} parent=1 // loop_footer
      %s21 = sadd.s32 1, %s17
    $region7: #{tpu_custom_call.1} parent=1 // loop_footer_branch
      %16 = sbr.rel target = $region3
    $region8: #{tpu_custom_call.1} parent=1 // loop_exit
      _
    %1693 = vsyncpa [#allocation4], 1
    %s1694 = scalar_lea.sflag [#allocation4], 1
    %1695 = vsyncpa %s1694, 1
    %1696 = vsyncpa [#allocation7], 1
    %1697 = vsyncpa [#allocation5], 1
    %s1698 = scalar_lea.sflag [#allocation5], 1
    %1699 = vsyncpa %s1698, 1

</llo_original>
